<compile_context>
chip_gen: v5e
topology: v5e:2x2
jax: 0.10.0
libtpu: 0.0.40
codegen_flags: <defaults>
</compile_context>

<pallas_src>
import functools
import warnings

import jax
import jax.numpy as jnp
import numpy as np
from jax.experimental import pallas as pl
from jax.experimental.pallas import tpu as pltpu

_EPS = 1e-12
_LANES = 128
_SUBLANES = 8


def _round_up(x, m):
    return ((x + m - 1) // m) * m


def _vmem_config():
    """Generation-aware VMEM working-set budget and compiler limit."""
    try:
        cap = int(pltpu.get_tpu_info().vmem_capacity_bytes)
    except Exception:
        cap = None
    if not cap or cap <= 0:
        cap = 64 * 1024 * 1024  # conservative: v7x per-core VMEM
    limit = max(32 * 1024 * 1024, min(int(cap * 0.85), cap - (8 << 20)))
    budget = int(limit * 0.85)
    return budget, limit


def _est_vmem(tile, tk, emb_itemsize):
    """Rough per-step VMEM working set (double-buffered pipeline streams)."""
    emb = 2 * (2 * tile * tk * emb_itemsize)        # emb_i + emb_j blocks
    cols = 2 * (2 * tile * _LANES * 4)              # sq_i + lbl_i columns (lane-padded)
    rows = 2 * (2 * _SUBLANES * tile * 4)           # sq_j + lbl_j rows (sublane-padded)
    dist = 2 * tile * tile * 4                      # metric output block
    acc = tile * tile * 4                           # Gram accumulator scratch
    inter = 6 * tile * tile * 4                     # g/metric/per/iota intermediates
    lp = 2 * _SUBLANES * _LANES * 4                 # loss-partial block
    return emb + cols + rows + dist + acc + inter + lp


def _choose_tiles(n, d, emb_itemsize, budget):
    """Pick (tile, tk): tile over the NxN metric, tk the D-block (K axis)."""
    tile = min(512, _round_up(n, _LANES))
    while True:
        # Prefer a single K step (tk == D, no D padding) if it fits.
        if _est_vmem(tile, d, emb_itemsize) <= budget:
            return tile, d
        # Otherwise K-block D: largest lane-aligned tk within budget.
        tk = min(1024, _round_up(d, _LANES))
        while tk > _LANES and _est_vmem(tile, tk, emb_itemsize) > budget:
            tk -= _LANES
        if _est_vmem(tile, tk, emb_itemsize) <= budget:
            return tile, tk
        if tile <= _LANES:
            return _LANES, _LANES  # last resort
        tile -= _LANES


def _gram_contrastive_kernel(i_idx_ref, j_idx_ref,
                             emb_i_ref, emb_j_ref, sqi_ref, sqj_ref,
                             lbli_ref, lblj_ref,
                             dist_ref, lp_ref, acc_ref, *,
                             margin, use_cosine, n_valid, tile, n_k):
    t = pl.program_id(0)
    k = pl.program_id(1)
    ib = i_idx_ref[t]
    jb = j_idx_ref[t]

    @pl.when(k == 0)
    def _():
        acc_ref[...] = jnp.zeros_like(acc_ref)

    # MXU: partial Gram over this D-block; no explicit transpose of emb_j.
    acc_ref[...] += jax.lax.dot_general(
        emb_i_ref[...], emb_j_ref[...], (((1,), (1,)), ((), ())),
        preferred_element_type=jnp.float32)

    @pl.when(k == n_k - 1)
    def _():
        g = acc_ref[...]                                    # [TILE, TILE] f32
        sq_i = sqi_ref[...].astype(jnp.float32)             # [TILE, 1]
        sq_j = sqj_ref[...].astype(jnp.float32)             # [1, TILE]

        if use_cosine:
            # 1 - x1.x2 / (max(||x1||,eps) * max(||x2||,eps)); rsqrt -> EUP.
            inv_ni = jax.lax.rsqrt(jnp.maximum(sq_i, _EPS * _EPS))
            inv_nj = jax.lax.rsqrt(jnp.maximum(sq_j, _EPS * _EPS))
            metric = 1.0 - g * inv_ni * inv_nj
        else:
            # TODO(synk): torch pairwise_distance adds eps=1e-12 per coordinate
            # before the norm; that O(1e-12) additive term is dropped here.
            d2 = jnp.maximum(sq_i + sq_j - 2.0 * g, 0.0)
            metric = jnp.sqrt(d2)

        dist_ref[...] = metric                              # lane-dense write

        # Pair mask rebuilt in-kernel (AllPairSelector semantics): a pair is
        # used iff global_row < global_col and both rows are real (< n_valid);
        # positive iff labels match, negative otherwise.
        lbl_i = lbli_ref[...]                               # [TILE, 1] int32
        lbl_j = lblj_ref[...]                               # [1, TILE] int32
        row = ib * tile + jax.lax.broadcasted_iota(jnp.int32, (tile, tile), 0)
        col = jb * tile + jax.lax.broadcasted_iota(jnp.int32, (tile, tile), 1)
        valid = (row < col) & (row < n_valid) & (col < n_valid)
        same = lbl_i == lbl_j

        hinge = jnp.maximum(jnp.float32(margin) - metric, 0.0)
        per = (jnp.where(valid & same, metric, 0.0)
               + jnp.where(valid & (~same), hinge, 0.0))

        # Fold [TILE, TILE] -> [8, 128] with pure VALU adds (no XLU reduce,
        # no serial scalar accumulator).
        folded = per[:, 0:_LANES]
        for c in range(1, tile // _LANES):
            folded = folded + per[:, c * _LANES:(c + 1) * _LANES]
        part = folded[0:_SUBLANES, :]
        for r in range(1, tile // _SUBLANES):
            part = part + folded[r * _SUBLANES:(r + 1) * _SUBLANES, :]

        # The first tile visited for a given i-row is the diagonal (jb == ib):
        # initialize the resident loss-partial block there.
        @pl.when(jb == ib)
        def _():
            lp_ref[...] = jnp.zeros_like(lp_ref)

        lp_ref[...] += part


def _run_kernel(emb_pad, sq_col, sq_row, lbl_col, lbl_row, i_idx, j_idx, *,
                margin, use_cosine, tile, tk, n_valid, vmem_limit):
    n_pad, d_pad = emb_pad.shape
    n_i = n_pad // tile
    n_k = d_pad // tk
    n_steps = int(i_idx.shape[0])

    kernel = functools.partial(
        _gram_contrastive_kernel,
        margin=float(margin),
        use_cosine=bool(use_cosine),
        n_valid=int(n_valid),
        tile=int(tile),
        n_k=int(n_k),
    )

    grid_spec = pltpu.PrefetchScalarGridSpec(
        num_scalar_prefetch=2,                      # i_idx, j_idx (SMEM)
        grid=(n_steps, n_k),                        # triangular tiles x D-blocks
        in_specs=[
            pl.BlockSpec((tile, tk), lambda t, k, ii, jj: (ii[t], k)),   # emb rows (i)
            pl.BlockSpec((tile, tk), lambda t, k, ii, jj: (jj[t], k)),   # emb rows (j)
            pl.BlockSpec((tile, 1), lambda t, k, ii, jj: (ii[t], 0)),    # ||e_i||^2
            pl.BlockSpec((1, tile), lambda t, k, ii, jj: (0, jj[t])),    # ||e_j||^2
            pl.BlockSpec((tile, 1), lambda t, k, ii, jj: (ii[t], 0)),    # label_i
            pl.BlockSpec((1, tile), lambda t, k, ii, jj: (0, jj[t])),    # label_j
        ],
        out_specs=[
            pl.BlockSpec((tile, tile), lambda t, k, ii, jj: (ii[t], jj[t])),
            pl.BlockSpec((_SUBLANES, _LANES), lambda t, k, ii, jj: (ii[t], 0)),
        ],
        scratch_shapes=[pltpu.VMEM((tile, tile), jnp.float32)],   # Gram accumulator
    )

    dist_mat, loss_partial = pl.pallas_call(
        kernel,
        grid_spec=grid_spec,
        out_shape=(
            jax.ShapeDtypeStruct((n_pad, n_pad), jnp.float32),
            jax.ShapeDtypeStruct((n_i * _SUBLANES, _LANES), jnp.float32),
        ),
        compiler_params=pltpu.CompilerParams(
            dimension_semantics=("arbitrary", "arbitrary"),
            vmem_limit_bytes=int(vmem_limit),
        ),
    )(i_idx, j_idx, emb_pad, emb_pad, sq_col, sq_row, lbl_col, lbl_row)
    return dist_mat, loss_partial


class AllPairSelector:
    """Vectorized pair selector: all i<j pairs, positive iff labels match."""

    def get_pairs(self, embeddings, target, is_front=None, is_ref=None):
        labels = np.asarray(target).reshape(-1)
        n = labels.shape[0]
        iu, ju = np.triu_indices(n, k=1)
        same = labels[iu] == labels[ju]
        pos = np.stack([iu[same], ju[same]], axis=1).astype(np.int32)
        neg = np.stack([iu[~same], ju[~same]], axis=1).astype(np.int32)
        if pos.shape[0] == 0 or neg.shape[0] == 0:
            return None, None
        return pos, neg


class OnlineContrastiveLossPallas:
    def __init__(self, margin, pair_selector, use_cosine=False, mxu_dtype=None):
        self.margin = margin
        self.pair_selector = pair_selector
        self.use_cosine = use_cosine
        # Optional narrower dtype for the MXU feed (e.g. jnp.bfloat16): halves
        # embedding HBM/DMA traffic; metric/hinge math stays f32.  Default None
        # keeps the input dtype so tight per-pair tolerances hold.
        self.mxu_dtype = mxu_dtype

    def __call__(self, embeddings, target, is_front=None, is_ref=None):
        positive_pairs, negative_pairs = self.pair_selector.get_pairs(
            embeddings, target, is_front, is_ref=is_ref)
        if positive_pairs is None or negative_pairs is None:
            warnings.warn(f"not enough pairs for target {target}")
            return None

        n_pos = int(positive_pairs.shape[0])
        n_neg = int(negative_pairs.shape[0])
        m = n_pos + n_neg
        all_pairs = np.concatenate([positive_pairs, negative_pairs], axis=0)

        emb = jnp.asarray(embeddings)
        n, d = emb.shape

        budget, vmem_limit = _vmem_config()
        kernel_dtype = jnp.dtype(self.mxu_dtype) if self.mxu_dtype else emb.dtype
        tile, tk = _choose_tiles(n, d, jnp.dtype(kernel_dtype).itemsize, budget)
        n_pad = _round_up(n, tile)
        d_pad = d if tk == d else _round_up(d, tk)

        # Host glue: zero-pad embeddings, precompute squared norms (row and
        # column layouts), and pad labels with -1 (padded rows are masked by
        # the in-kernel row/col < n check anyway).
        emb_pad = jnp.zeros((n_pad, d_pad), emb.dtype).at[:n, :d].set(emb)
        sq = jnp.sum(emb_pad.astype(jnp.float32) ** 2, axis=-1)
        sq_col = sq.reshape(n_pad, 1)
        sq_row = sq.reshape(1, n_pad)

        labels_np = np.full((n_pad,), -1, dtype=np.int32)
        labels_np[:n] = np.asarray(target).reshape(-1).astype(np.int32)
        lbl_col = jnp.asarray(labels_np.reshape(n_pad, 1))
        lbl_row = jnp.asarray(labels_np.reshape(1, n_pad))

        emb_kernel = emb_pad if self.mxu_dtype is None else emb_pad.astype(kernel_dtype)

        # Triangular schedule (i outer, j inner, j >= i) as scalar-prefetch
        # index arrays: lower-triangle tiles are never touched.
        n_i = n_pad // tile
        ii, jj = np.triu_indices(n_i, k=0)
        i_idx = jnp.asarray(ii.astype(np.int32))
        j_idx = jnp.asarray(jj.astype(np.int32))

        # TODO(synk): the in-kernel loss mask assumes label-equality pair
        # selection (AllPairSelector); an arbitrary pair_selector would need an
        # explicit mask input instead.
        dist_mat, loss_partial = _run_kernel(
            emb_kernel, sq_col, sq_row, lbl_col, lbl_row, i_idx, j_idx,
            margin=self.margin, use_cosine=self.use_cosine,
            tile=tile, tk=tk, n_valid=n, vmem_limit=vmem_limit)

        loss = jnp.sum(loss_partial) / jnp.float32(m)

        # Per-pair outputs gathered from the metric matrix (cheap O(M) glue).
        pair_metric = dist_mat[all_pairs[:, 0], all_pairs[:, 1]]
        positive_loss = pair_metric[:n_pos]
        negative_loss = jnp.maximum(self.margin - pair_metric[n_pos:], 0.0)

        out = {}
        out["loss"] = loss
        out["embeddings"] = (emb[all_pairs[:, 0]], emb[all_pairs[:, 1]])
        out["contrastive_targets"] = jnp.concatenate(
            [jnp.ones((n_pos,), jnp.float32), jnp.zeros((n_neg,), jnp.float32)])
        out["contrastive_pos_distances"] = positive_loss
        out["contrastive_neg_distances"] = negative_loss
        out["contrastive_distances"] = jnp.concatenate(
            [positive_loss, negative_loss])
        return out


def _reference(embeddings, pos_pairs, neg_pairs, margin, use_cosine):
    e = np.asarray(embeddings, np.float64)

    def metric(pairs):
        a, b = e[pairs[:, 0]], e[pairs[:, 1]]
        if use_cosine:
            na = np.maximum(np.linalg.norm(a, axis=-1), _EPS)
            nb = np.maximum(np.linalg.norm(b, axis=-1), _EPS)
            return 1.0 - np.sum(a * b, axis=-1) / (na * nb)
        return np.sqrt(np.sum((a - b + _EPS) ** 2, axis=-1))

    pos = metric(pos_pairs)
    neg = np.maximum(margin - metric(neg_pairs), 0.0)
    return np.concatenate([pos, neg]).mean(), pos, neg


if __name__ == "__main__":
    key = jax.random.PRNGKey(0)
    N, D = 8, 32  # batch of 8 embeddings, hidden=32
    margin = 1.0

    embeddings = jax.random.normal(key, (N, D), dtype=jnp.float32)
    target = np.array([0, 0, 1, 1, 2, 2, 3, 3], dtype=np.int32)
    pos_pairs, neg_pairs = AllPairSelector().get_pairs(embeddings, target)

    # Euclidean path
    loss_fn = OnlineContrastiveLossPallas(margin, AllPairSelector(),
                                          use_cosine=False)
    out = loss_fn(embeddings, target)
    jax.block_until_ready(out["loss"])
    ref_loss, ref_pos, ref_neg = _reference(embeddings, pos_pairs, neg_pairs,
                                            margin, use_cosine=False)
    assert np.allclose(np.asarray(out["loss"]), ref_loss, rtol=1e-4, atol=1e-4)
    assert np.allclose(np.asarray(out["contrastive_pos_distances"]), ref_pos,
                       rtol=1e-4, atol=1e-4)
    assert np.allclose(np.asarray(out["contrastive_neg_distances"]), ref_neg,
                       rtol=1e-4, atol=1e-4)

    # Cosine path
    loss_fn_c = OnlineContrastiveLossPallas(margin, AllPairSelector(),
                                            use_cosine=True)
    out_c = loss_fn_c(embeddings, target)
    jax.block_until_ready(out_c["loss"])
    ref_loss_c, ref_pos_c, ref_neg_c = _reference(
        embeddings, pos_pairs, neg_pairs, margin, use_cosine=True)
    assert np.allclose(np.asarray(out_c["loss"]), ref_loss_c,
                       rtol=1e-4, atol=1e-4)
    assert np.allclose(np.asarray(out_c["contrastive_pos_distances"]),
                       ref_pos_c, rtol=1e-4, atol=1e-4)
    assert np.allclose(np.asarray(out_c["contrastive_neg_distances"]),
                       ref_neg_c, rtol=1e-4, atol=1e-4)

    print("KERNEL_OK")
</pallas_src>

<mosaic_0001>
module attributes {stable_mosaic.version = 11 : i64} {
  func.func @_gram_contrastive_kernel(%arg0: i32, %arg1: i32, %arg2: memref<1xi32, #tpu.memory_space<smem>>, %arg3: memref<1xi32, #tpu.memory_space<smem>>, %arg4: memref<128x32xf32, #tpu.memory_space<vmem>>, %arg5: memref<128x32xf32, #tpu.memory_space<vmem>>, %arg6: memref<128x1xf32, #tpu.memory_space<vmem>>, %arg7: memref<1x128xf32, #tpu.memory_space<vmem>>, %arg8: memref<128x1xi32, #tpu.memory_space<vmem>>, %arg9: memref<1x128xi32, #tpu.memory_space<vmem>>, %arg10: memref<128x128xf32, #tpu.memory_space<vmem>>, %arg11: memref<8x128xf32, #tpu.memory_space<vmem>>, %arg12: memref<128x128xf32, #tpu.memory_space<vmem>>) attributes {dimension_semantics = [#tpu.dimension_semantics<arbitrary>, #tpu.dimension_semantics<arbitrary>], iteration_bounds = array<i64: 1, 1>, scalar_prefetch = 2 : i64, scratch_operands = 1 : i64, tpu.core_type = #tpu.core_type<tc>, window_params = [{transform_indices = @transform_0, window_bounds = array<i64: 128, 32>}, {transform_indices = @transform_1, window_bounds = array<i64: 128, 32>}, {transform_indices = @transform_2, window_bounds = array<i64: 128, 1>}, {transform_indices = @transform_3, window_bounds = array<i64: 1, 128>}, {transform_indices = @transform_4, window_bounds = array<i64: 128, 1>}, {transform_indices = @transform_5, window_bounds = array<i64: 1, 128>}, {transform_indices = @transform_6, window_bounds = array<i64: 128, 128>}, {transform_indices = @transform_7, window_bounds = array<i64: 8, 128>}]} {
    %0 = arith.index_cast %arg0 : i32 to index
    %1 = memref.load %arg2[%0] : memref<1xi32, #tpu.memory_space<smem>>
    %2 = arith.index_cast %arg0 : i32 to index
    %3 = memref.load %arg3[%2] : memref<1xi32, #tpu.memory_space<smem>>
    %c0_i32 = arith.constant 0 : i32
    %4 = arith.cmpi eq, %arg1, %c0_i32 : i32
    %5 = arith.extui %4 : i1 to i32
    %c0_i32_0 = arith.constant 0 : i32
    %6 = arith.cmpi ne, %5, %c0_i32_0 : i32
    scf.if %6 {
      %cst_10 = arith.constant 0.000000e+00 : f32
      %16 = vector.broadcast %cst_10 : f32 to vector<128x128xf32>
      %c0_11 = arith.constant 0 : index
      %c0_12 = arith.constant 0 : index
      %17 = vector.load %arg12[%c0_11, %c0_12] : memref<128x128xf32, #tpu.memory_space<vmem>>, vector<128x128xf32>
      tpu.vector_store %arg12[%c0_11, %c0_12], %16 {strides = array<i32>} : memref<128x128xf32, #tpu.memory_space<vmem>>, vector<128x128xf32>,
    } else {
    }
    %c0 = arith.constant 0 : index
    %c0_1 = arith.constant 0 : index
    %7 = vector.load %arg12[%c0, %c0_1] : memref<128x128xf32, #tpu.memory_space<vmem>>, vector<128x128xf32>
    %c0_2 = arith.constant 0 : index
    %c0_3 = arith.constant 0 : index
    %8 = vector.load %arg4[%c0_2, %c0_3] : memref<128x32xf32, #tpu.memory_space<vmem>>, vector<128x32xf32>
    %c0_4 = arith.constant 0 : index
    %c0_5 = arith.constant 0 : index
    %9 = vector.load %arg5[%c0_4, %c0_5] : memref<128x32xf32, #tpu.memory_space<vmem>>, vector<128x32xf32>
    %cst = arith.constant dense<0.000000e+00> : vector<128x128xf32>
    %10 = tpu.matmul %8, %9, %cst {dimension_numbers = #tpu.dot_dimension_numbers<[1], [1], [0], [0], [0, 0, 1, 0], [], []>} : vector<128x32xf32>, vector<128x32xf32>, vector<128x128xf32> -> vector<128x128xf32>
    %11 = arith.addf %7, %10 : vector<128x128xf32>
    %c0_6 = arith.constant 0 : index
    %c0_7 = arith.constant 0 : index
    %12 = vector.load %arg12[%c0_6, %c0_7] : memref<128x128xf32, #tpu.memory_space<vmem>>, vector<128x128xf32>
    tpu.vector_store %arg12[%c0_6, %c0_7], %11 {strides = array<i32>} : memref<128x128xf32, #tpu.memory_space<vmem>>, vector<128x128xf32>,
    %c0_i32_8 = arith.constant 0 : i32
    %13 = arith.cmpi eq, %arg1, %c0_i32_8 : i32
    %14 = arith.extui %13 : i1 to i32
    %c0_i32_9 = arith.constant 0 : i32
    %15 = arith.cmpi ne, %14, %c0_i32_9 : i32
    scf.if %15 {
      %c0_10 = arith.constant 0 : index
      %c0_11 = arith.constant 0 : index
      %16 = vector.load %arg12[%c0_10, %c0_11] : memref<128x128xf32, #tpu.memory_space<vmem>>, vector<128x128xf32>
      %c0_12 = arith.constant 0 : index
      %c0_13 = arith.constant 0 : index
      %17 = vector.load %arg6[%c0_12, %c0_13] : memref<128x1xf32, #tpu.memory_space<vmem>>, vector<128x1xf32>
      %c0_14 = arith.constant 0 : index
      %c0_15 = arith.constant 0 : index
      %18 = vector.load %arg7[%c0_14, %c0_15] : memref<1x128xf32, #tpu.memory_space<vmem>>, vector<1x128xf32>
      %19 = vector.broadcast %17 : vector<128x1xf32> to vector<128x128xf32>
      %20 = vector.broadcast %18 : vector<1x128xf32> to vector<128x128xf32>
      %21 = arith.addf %19, %20 : vector<128x128xf32>
      %cst_16 = arith.constant 2.000000e+00 : f32
      %22 = vector.broadcast %cst_16 : f32 to vector<128x128xf32>
      %23 = arith.mulf %22, %16 : vector<128x128xf32>
      %24 = arith.subf %21, %23 : vector<128x128xf32>
      %cst_17 = arith.constant 0.000000e+00 : f32
      %25 = vector.broadcast %cst_17 : f32 to vector<128x128xf32>
      %26 = arith.maximumf %24, %25 : vector<128x128xf32>
      %27 = math.sqrt %26 : vector<128x128xf32>
      %c0_18 = arith.constant 0 : index
      %c0_19 = arith.constant 0 : index
      %28 = vector.load %arg10[%c0_18, %c0_19] : memref<128x128xf32, #tpu.memory_space<vmem>>, vector<128x128xf32>
      tpu.vector_store %arg10[%c0_18, %c0_19], %27 {strides = array<i32>} : memref<128x128xf32, #tpu.memory_space<vmem>>, vector<128x128xf32>,
      %c0_20 = arith.constant 0 : index
      %c0_21 = arith.constant 0 : index
      %29 = vector.load %arg8[%c0_20, %c0_21] : memref<128x1xi32, #tpu.memory_space<vmem>>, vector<128x1xi32>
      %c0_22 = arith.constant 0 : index
      %c0_23 = arith.constant 0 : index
      %30 = vector.load %arg9[%c0_22, %c0_23] : memref<1x128xi32, #tpu.memory_space<vmem>>, vector<1x128xi32>
      %c128_i32 = arith.constant 128 : i32
      %31 = arith.muli %1, %c128_i32 : i32
      %32 = tpu.iota {dimensions = array<i32: 0>} : vector<128x128xi32>
      %33 = vector.broadcast %31 : i32 to vector<128x128xi32>
      %34 = arith.addi %33, %32 : vector<128x128xi32>
      %c128_i32_24 = arith.constant 128 : i32
      %35 = arith.muli %3, %c128_i32_24 : i32
      %36 = tpu.iota {dimensions = array<i32: 1>} : vector<128x128xi32>
      %37 = vector.broadcast %35 : i32 to vector<128x128xi32>
      %38 = arith.addi %37, %36 : vector<128x128xi32>
      %39 = arith.cmpi slt, %34, %38 : vector<128x128xi32>
      %c8_i32 = arith.constant 8 : i32
      %40 = vector.broadcast %c8_i32 : i32 to vector<128x128xi32>
      %41 = arith.cmpi slt, %34, %40 : vector<128x128xi32>
      %42 = arith.andi %39, %41 : vector<128x128xi1>
      %c8_i32_25 = arith.constant 8 : i32
      %43 = vector.broadcast %c8_i32_25 : i32 to vector<128x128xi32>
      %44 = arith.cmpi slt, %38, %43 : vector<128x128xi32>
      %45 = arith.andi %42, %44 : vector<128x128xi1>
      %46 = vector.broadcast %29 : vector<128x1xi32> to vector<128x128xi32>
      %47 = vector.broadcast %30 : vector<1x128xi32> to vector<128x128xi32>
      %48 = arith.cmpi eq, %46, %47 : vector<128x128xi32>
      %cst_26 = arith.constant 1.000000e+00 : f32
      %49 = vector.broadcast %cst_26 : f32 to vector<128x128xf32>
      %50 = arith.subf %49, %27 : vector<128x128xf32>
      %cst_27 = arith.constant 0.000000e+00 : f32
      %51 = vector.broadcast %cst_27 : f32 to vector<128x128xf32>
      %52 = arith.maximumf %50, %51 : vector<128x128xf32>
      %53 = arith.andi %45, %48 : vector<128x128xi1>
      %cst_28 = arith.constant 0.000000e+00 : f32
      %54 = vector.broadcast %cst_28 : f32 to vector<128x128xf32>
      %55 = arith.select %53, %27, %54 : vector<128x128xi1>, vector<128x128xf32>
      %cst_29 = arith.constant dense<true> : vector<128x128xi1>
      %56 = arith.xori %48, %cst_29 : vector<128x128xi1>
      %57 = arith.andi %45, %56 : vector<128x128xi1>
      %cst_30 = arith.constant 0.000000e+00 : f32
      %58 = vector.broadcast %cst_30 : f32 to vector<128x128xf32>
      %59 = arith.select %57, %52, %58 : vector<128x128xi1>, vector<128x128xf32>
      %60 = arith.addf %55, %59 : vector<128x128xf32>
      %61 = vector.extract_strided_slice %60 {offsets = [0, 0], sizes = [8, 128], strides = [1, 1]} : vector<128x128xf32> to vector<8x128xf32>
      %62 = vector.extract_strided_slice %60 {offsets = [8, 0], sizes = [8, 128], strides = [1, 1]} : vector<128x128xf32> to vector<8x128xf32>
      %63 = arith.addf %61, %62 : vector<8x128xf32>
      %64 = vector.extract_strided_slice %60 {offsets = [16, 0], sizes = [8, 128], strides = [1, 1]} : vector<128x128xf32> to vector<8x128xf32>
      %65 = arith.addf %63, %64 : vector<8x128xf32>
      %66 = vector.extract_strided_slice %60 {offsets = [24, 0], sizes = [8, 128], strides = [1, 1]} : vector<128x128xf32> to vector<8x128xf32>
      %67 = arith.addf %65, %66 : vector<8x128xf32>
      %68 = vector.extract_strided_slice %60 {offsets = [32, 0], sizes = [8, 128], strides = [1, 1]} : vector<128x128xf32> to vector<8x128xf32>
      %69 = arith.addf %67, %68 : vector<8x128xf32>
      %70 = vector.extract_strided_slice %60 {offsets = [40, 0], sizes = [8, 128], strides = [1, 1]} : vector<128x128xf32> to vector<8x128xf32>
      %71 = arith.addf %69, %70 : vector<8x128xf32>
      %72 = vector.extract_strided_slice %60 {offsets = [48, 0], sizes = [8, 128], strides = [1, 1]} : vector<128x128xf32> to vector<8x128xf32>
      %73 = arith.addf %71, %72 : vector<8x128xf32>
      %74 = vector.extract_strided_slice %60 {offsets = [56, 0], sizes = [8, 128], strides = [1, 1]} : vector<128x128xf32> to vector<8x128xf32>
      %75 = arith.addf %73, %74 : vector<8x128xf32>
      %76 = vector.extract_strided_slice %60 {offsets = [64, 0], sizes = [8, 128], strides = [1, 1]} : vector<128x128xf32> to vector<8x128xf32>
      %77 = arith.addf %75, %76 : vector<8x128xf32>
      %78 = vector.extract_strided_slice %60 {offsets = [72, 0], sizes = [8, 128], strides = [1, 1]} : vector<128x128xf32> to vector<8x128xf32>
      %79 = arith.addf %77, %78 : vector<8x128xf32>
      %80 = vector.extract_strided_slice %60 {offsets = [80, 0], sizes = [8, 128], strides = [1, 1]} : vector<128x128xf32> to vector<8x128xf32>
      %81 = arith.addf %79, %80 : vector<8x128xf32>
      %82 = vector.extract_strided_slice %60 {offsets = [88, 0], sizes = [8, 128], strides = [1, 1]} : vector<128x128xf32> to vector<8x128xf32>
      %83 = arith.addf %81, %82 : vector<8x128xf32>
      %84 = vector.extract_strided_slice %60 {offsets = [96, 0], sizes = [8, 128], strides = [1, 1]} : vector<128x128xf32> to vector<8x128xf32>
      %85 = arith.addf %83, %84 : vector<8x128xf32>
      %86 = vector.extract_strided_slice %60 {offsets = [104, 0], sizes = [8, 128], strides = [1, 1]} : vector<128x128xf32> to vector<8x128xf32>
      %87 = arith.addf %85, %86 : vector<8x128xf32>
      %88 = vector.extract_strided_slice %60 {offsets = [112, 0], sizes = [8, 128], strides = [1, 1]} : vector<128x128xf32> to vector<8x128xf32>
      %89 = arith.addf %87, %88 : vector<8x128xf32>
      %90 = vector.extract_strided_slice %60 {offsets = [120, 0], sizes = [8, 128], strides = [1, 1]} : vector<128x128xf32> to vector<8x128xf32>
      %91 = arith.addf %89, %90 : vector<8x128xf32>
      %92 = arith.cmpi eq, %3, %1 : i32
      %93 = arith.extui %92 : i1 to i32
      %c0_i32_31 = arith.constant 0 : i32
      %94 = arith.cmpi ne, %93, %c0_i32_31 : i32
      scf.if %94 {
        %cst_36 = arith.constant 0.000000e+00 : f32
        %98 = vector.broadcast %cst_36 : f32 to vector<8x128xf32>
        %c0_37 = arith.constant 0 : index
        %c0_38 = arith.constant 0 : index
        %99 = vector.load %arg11[%c0_37, %c0_38] : memref<8x128xf32, #tpu.memory_space<vmem>>, vector<8x128xf32>
        tpu.vector_store %arg11[%c0_37, %c0_38], %98 {strides = array<i32>} : memref<8x128xf32, #tpu.memory_space<vmem>>, vector<8x128xf32>,
      } else {
      }
      %c0_32 = arith.constant 0 : index
      %c0_33 = arith.constant 0 : index
      %95 = vector.load %arg11[%c0_32, %c0_33] : memref<8x128xf32, #tpu.memory_space<vmem>>, vector<8x128xf32>
      %96 = arith.addf %95, %91 : vector<8x128xf32>
      %c0_34 = arith.constant 0 : index
      %c0_35 = arith.constant 0 : index
      %97 = vector.load %arg11[%c0_34, %c0_35] : memref<8x128xf32, #tpu.memory_space<vmem>>, vector<8x128xf32>
      tpu.vector_store %arg11[%c0_34, %c0_35], %96 {strides = array<i32>} : memref<8x128xf32, #tpu.memory_space<vmem>>, vector<8x128xf32>,
    } else {
    }
    return
  }
  func.func @transform_0(%arg0: i32, %arg1: i32, %arg2: memref<1xi32, #tpu.memory_space<smem>>, %arg3: memref<1xi32, #tpu.memory_space<smem>>) -> (i32, i32) {
    %0 = arith.index_cast %arg0 : i32 to index
    %1 = memref.load %arg2[%0] : memref<1xi32, #tpu.memory_space<smem>>
    %c0_i32 = arith.constant 0 : i32
    return %1, %arg1 : i32, i32
  }
  func.func @transform_1(%arg0: i32, %arg1: i32, %arg2: memref<1xi32, #tpu.memory_space<smem>>, %arg3: memref<1xi32, #tpu.memory_space<smem>>) -> (i32, i32) {
    %0 = arith.index_cast %arg0 : i32 to index
    %1 = memref.load %arg3[%0] : memref<1xi32, #tpu.memory_space<smem>>
    %c0_i32 = arith.constant 0 : i32
    return %1, %arg1 : i32, i32
  }
  func.func @transform_2(%arg0: i32, %arg1: i32, %arg2: memref<1xi32, #tpu.memory_space<smem>>, %arg3: memref<1xi32, #tpu.memory_space<smem>>) -> (i32, i32) {
    %0 = arith.index_cast %arg0 : i32 to index
    %1 = memref.load %arg2[%0] : memref<1xi32, #tpu.memory_space<smem>>
    %c0_i32 = arith.constant 0 : i32
    %c0_i32_0 = arith.constant 0 : i32
    return %1, %c0_i32 : i32, i32
  }
  func.func @transform_3(%arg0: i32, %arg1: i32, %arg2: memref<1xi32, #tpu.memory_space<smem>>, %arg3: memref<1xi32, #tpu.memory_space<smem>>) -> (i32, i32) {
    %0 = arith.index_cast %arg0 : i32 to index
    %1 = memref.load %arg3[%0] : memref<1xi32, #tpu.memory_space<smem>>
    %c0_i32 = arith.constant 0 : i32
    %c0_i32_0 = arith.constant 0 : i32
    return %c0_i32, %1 : i32, i32
  }
  func.func @transform_4(%arg0: i32, %arg1: i32, %arg2: memref<1xi32, #tpu.memory_space<smem>>, %arg3: memref<1xi32, #tpu.memory_space<smem>>) -> (i32, i32) {
    %0 = arith.index_cast %arg0 : i32 to index
    %1 = memref.load %arg2[%0] : memref<1xi32, #tpu.memory_space<smem>>
    %c0_i32 = arith.constant 0 : i32
    %c0_i32_0 = arith.constant 0 : i32
    return %1, %c0_i32 : i32, i32
  }
  func.func @transform_5(%arg0: i32, %arg1: i32, %arg2: memref<1xi32, #tpu.memory_space<smem>>, %arg3: memref<1xi32, #tpu.memory_space<smem>>) -> (i32, i32) {
    %0 = arith.index_cast %arg0 : i32 to index
    %1 = memref.load %arg3[%0] : memref<1xi32, #tpu.memory_space<smem>>
    %c0_i32 = arith.constant 0 : i32
    %c0_i32_0 = arith.constant 0 : i32
    return %c0_i32, %1 : i32, i32
  }
  func.func @transform_6(%arg0: i32, %arg1: i32, %arg2: memref<1xi32, #tpu.memory_space<smem>>, %arg3: memref<1xi32, #tpu.memory_space<smem>>) -> (i32, i32) {
    %0 = arith.index_cast %arg0 : i32 to index
    %1 = memref.load %arg2[%0] : memref<1xi32, #tpu.memory_space<smem>>
    %2 = arith.index_cast %arg0 : i32 to index
    %3 = memref.load %arg3[%2] : memref<1xi32, #tpu.memory_space<smem>>
    %c0_i32 = arith.constant 0 : i32
    return %1, %3 : i32, i32
  }
  func.func @transform_7(%arg0: i32, %arg1: i32, %arg2: memref<1xi32, #tpu.memory_space<smem>>, %arg3: memref<1xi32, #tpu.memory_space<smem>>) -> (i32, i32) {
    %0 = arith.index_cast %arg0 : i32 to index
    %1 = memref.load %arg2[%0] : memref<1xi32, #tpu.memory_space<smem>>
    %c0_i32 = arith.constant 0 : i32
    %c0_i32_0 = arith.constant 0 : i32
    return %1, %c0_i32 : i32, i32
  }
}

</mosaic_0001>

<llo_original>
// kernel: tpu_custom_call.1
$region0: #{tpu_custom_call.1}
  #allocation0 [shape = 'u32[]', space=smem, size = 0x4, offset = 0x4, fixed_abs, tag = 'smem constant byte address 0x4 - core index']
  #allocation1 [shape = 'u32[72,128]{1,0:T(1,128)}', space=vmem, size = 0x9000, scoped, tag = 'internal scratch']
  #allocation2 [shape = 'f32[128,128]{1,0:T(8,128)}', space=vmem, size = 0x10000, scoped, tag = 'scratch operand']
  #allocation3 [shape = 's32[1]{0}', space=sflag, size = 0x4, scoped, tag = 'scoped memory for tpu_custom_call.1']
  #allocation4 [shape = 's32[1]{0:T(128)S(6)}', space=smem, size = 0x200, scoped, tag = 'prefetched SMEM operand 0']
  #allocation5 [shape = 's32[1]{0:T(128)S(6)}', space=smem, size = 0x200, scoped, tag = 'prefetched SMEM operand 1']
  %s0 = inlined_call_operand.<no memory space> [shape: s32[1], index: 0, kind: input, shape index: {}]
  %s1 = inlined_call_operand.<no memory space> [shape: s32[1], index: 1, kind: input, shape index: {}]
  %s2 = inlined_call_operand.vmem [shape: f32[128,32], index: 2, kind: input, shape index: {}]
  %s3 = inlined_call_operand.vmem [shape: f32[128,32], index: 3, kind: input, shape index: {}]
  %s4 = inlined_call_operand.vmem [shape: f32[128,1], index: 4, kind: input, shape index: {}]
  %s5 = inlined_call_operand.vmem [shape: f32[1,128], index: 5, kind: input, shape index: {}]
  %s6 = inlined_call_operand.vmem [shape: s32[128,1], index: 6, kind: input, shape index: {}]
  %s7 = inlined_call_operand.vmem [shape: s32[1,128], index: 7, kind: input, shape index: {}]
  %s8 = inlined_call_operand.hbm [shape: f32[128,128], index: 8, kind: output, shape index: {0}]
  %s9 = inlined_call_operand.hbm [shape: f32[8,128], index: 9, kind: output, shape index: {1}]
  %10 = xla_tuple %s8, %s9
  %s11 = sld [smem:[#allocation0]]
  $region54: #{tpu_custom_call.1} parent=0
    _
  %s13 = ssub.s32 1, %s11
  %s14 = scalar_select 0, %s13, %s11
  %15 = sst [smem:[#allocation4]] %s0
  %16 = sst [smem:[#allocation5]] %s1
  $region1: #{tpu_custom_call.1} parent=0
    #allocation6 [shape = 'u8[65536]{0}', space=vmem, size = 0x10000, scoped, tag = 'output window, operand 0, single buffered']
    #allocation7 [shape = 's32[1]{0}', space=sflag, size = 0x4, scoped, tag = 'scoped memory for tpu_custom_call.1']
    #allocation8 [shape = 'u8[4096]{0}', space=vmem, size = 0x1000, scoped, tag = 'output window, operand 1, single buffered']
    #allocation9 [shape = 's32[1]{0}', space=sflag, size = 0x4, scoped, tag = 'scoped memory for tpu_custom_call.1']
    %17 = vsyncpa [#allocation7], 0
    %18 = vsyncpa [#allocation9], 0
    // Predicated region
    $region2: #{tpu_custom_call.1} parent=1 // pred_check
      _
    $region3: #{tpu_custom_call.1} parent=1 // pred_check_branch
      %20 = sbr.rel (0) target = $region5
    $region4: #{tpu_custom_call.1} parent=1 // pred_region
      %s21 = sld [smem:[#allocation4]]
      %s22 = smul.u32 16, %s21
      %p23 = scmp.lt.s32.totalorder %s22, 15
      %s24 = scalar_select %p23, %s22, 15
      %s25 = smul.addr %s24, 8
      %s26 = scalar_lea.vmem %s2, %s25
      %s27 = sld [smem:[#allocation4]]
      %s28 = smul.u32 16, %s27
    $region5: #{tpu_custom_call.1} parent=1 // pred_fallthru
      _
    // Predicated region
    $region6: #{tpu_custom_call.1} parent=1 // pred_check
      _
    $region7: #{tpu_custom_call.1} parent=1 // pred_check_branch
      %30 = sbr.rel (0) target = $region9
    $region8: #{tpu_custom_call.1} parent=1 // pred_region
      %s31 = sld [smem:[#allocation5]]
      %s32 = smul.u32 16, %s31
      %p33 = scmp.lt.s32.totalorder %s32, 15
      %s34 = scalar_select %p33, %s32, 15
      %s35 = smul.addr %s34, 8
      %s36 = scalar_lea.vmem %s3, %s35
      %s37 = sld [smem:[#allocation5]]
      %s38 = smul.u32 16, %s37
    $region9: #{tpu_custom_call.1} parent=1 // pred_fallthru
      _
    // Predicated region
    $region10: #{tpu_custom_call.1} parent=1 // pred_check
      _
    $region11: #{tpu_custom_call.1} parent=1 // pred_check_branch
      %40 = sbr.rel (0) target = $region13
    $region12: #{tpu_custom_call.1} parent=1 // pred_region
      %s41 = sld [smem:[#allocation4]]
      %s42 = smul.u32 16, %s41
      %p43 = scmp.lt.s32.totalorder %s42, 15
      %s44 = scalar_select %p43, %s42, 15
      %s45 = smul.addr %s44, 8
      %s46 = scalar_lea.vmem %s4, %s45
      %s47 = sld [smem:[#allocation4]]
      %s48 = smul.u32 16, %s47
    $region13: #{tpu_custom_call.1} parent=1 // pred_fallthru
      _
    // Predicated region
    $region14: #{tpu_custom_call.1} parent=1 // pred_check
      _
    $region15: #{tpu_custom_call.1} parent=1 // pred_check_branch
      %50 = sbr.rel (0) target = $region17
    $region16: #{tpu_custom_call.1} parent=1 // pred_region
      %s51 = sld [smem:[#allocation5]]
      %p52 = scmp.lt.s32.totalorder %s51, 0
      %s53 = scalar_select %p52, %s51, 0
      %s54 = scalar_lea.vmem %s5, %s53
      %s55 = sld [smem:[#allocation5]]
    $region17: #{tpu_custom_call.1} parent=1 // pred_fallthru
      _
    // Predicated region
    $region18: #{tpu_custom_call.1} parent=1 // pred_check
      _
    $region19: #{tpu_custom_call.1} parent=1 // pred_check_branch
      %57 = sbr.rel (0) target = $region21
    $region20: #{tpu_custom_call.1} parent=1 // pred_region
      %s58 = sld [smem:[#allocation4]]
      %s59 = smul.u32 16, %s58
      %p60 = scmp.lt.s32.totalorder %s59, 15
      %s61 = scalar_select %p60, %s59, 15
      %s62 = smul.addr %s61, 8
      %s63 = scalar_lea.vmem %s6, %s62
      %s64 = sld [smem:[#allocation4]]
      %s65 = smul.u32 16, %s64
    $region21: #{tpu_custom_call.1} parent=1 // pred_fallthru
      _
    // Predicated region
    $region22: #{tpu_custom_call.1} parent=1 // pred_check
      _
    $region23: #{tpu_custom_call.1} parent=1 // pred_check_branch
      %67 = sbr.rel (0) target = $region25
    $region24: #{tpu_custom_call.1} parent=1 // pred_region
      %s68 = sld [smem:[#allocation5]]
      %p69 = scmp.lt.s32.totalorder %s68, 0
      %s70 = scalar_select %p69, %s68, 0
      %s71 = scalar_lea.vmem %s7, %s70
      %s72 = sld [smem:[#allocation5]]
    $region25: #{tpu_custom_call.1} parent=1 // pred_fallthru
      _
    %s73 = sld [smem:[#allocation4]]
    %s74 = smul.u32 16, %s73
    %p75 = scmp.lt.s32.totalorder %s74, 15
    %s76 = scalar_select %p75, %s74, 15
    %s77 = smul.addr %s76, 8
    %s78 = scalar_lea.vmem %s2, %s77
    %s79 = sld [smem:[#allocation5]]
    %s80 = smul.u32 16, %s79
    %p81 = scmp.lt.s32.totalorder %s80, 15
    %s82 = scalar_select %p81, %s80, 15
    %s83 = smul.addr %s82, 8
    %s84 = scalar_lea.vmem %s3, %s83
    %s85 = sld [smem:[#allocation4]]
    %s86 = smul.u32 16, %s85
    %p87 = scmp.lt.s32.totalorder %s86, 15
    %s88 = scalar_select %p87, %s86, 15
    %s89 = smul.addr %s88, 8
    %s90 = scalar_lea.vmem %s4, %s89
    %s91 = sld [smem:[#allocation5]]
    %p92 = scmp.lt.s32.totalorder %s91, 0
    %s93 = scalar_select %p92, %s91, 0
    %s94 = scalar_lea.vmem %s5, %s93
    %s95 = sld [smem:[#allocation4]]
    %s96 = smul.u32 16, %s95
    %p97 = scmp.lt.s32.totalorder %s96, 15
    %s98 = scalar_select %p97, %s96, 15
    %s99 = smul.addr %s98, 8
    %s100 = scalar_lea.vmem %s6, %s99
    %s101 = sld [smem:[#allocation5]]
    %p102 = scmp.lt.s32.totalorder %s101, 0
    %s103 = scalar_select %p102, %s101, 0
    %s104 = scalar_lea.vmem %s7, %s103
    %s105 = sld [smem:[#allocation4]]
    %s106 = smul.u32 16, %s105
    %p107 = scmp.lt.s32.totalorder %s106, 15
    %s108 = scalar_select %p107, %s106, 15
    %s109 = smul.addr %s108, 8
    %s110 = scalar_lea.vmem %s2, %s109
    %s111 = sld [smem:[#allocation4]]
    %s112 = smul.u32 16, %s111
    %s113 = sld [smem:[#allocation5]]
    %s114 = smul.u32 16, %s113
    %p115 = scmp.lt.s32.totalorder %s114, 15
    %s116 = scalar_select %p115, %s114, 15
    %s117 = smul.addr %s116, 8
    %s118 = scalar_lea.vmem %s3, %s117
    %s119 = sld [smem:[#allocation5]]
    %s120 = smul.u32 16, %s119
    %s121 = sld [smem:[#allocation4]]
    %s122 = smul.u32 16, %s121
    %p123 = scmp.lt.s32.totalorder %s122, 15
    %s124 = scalar_select %p123, %s122, 15
    %s125 = smul.addr %s124, 8
    %s126 = scalar_lea.vmem %s4, %s125
    %s127 = sld [smem:[#allocation4]]
    %s128 = smul.u32 16, %s127
    %s129 = sld [smem:[#allocation5]]
    %p130 = scmp.lt.s32.totalorder %s129, 0
    %s131 = scalar_select %p130, %s129, 0
    %s132 = scalar_lea.vmem %s5, %s131
    %s133 = sld [smem:[#allocation5]]
    %s134 = sld [smem:[#allocation4]]
    %s135 = smul.u32 16, %s134
    %p136 = scmp.lt.s32.totalorder %s135, 15
    %s137 = scalar_select %p136, %s135, 15
    %s138 = smul.addr %s137, 8
    %s139 = scalar_lea.vmem %s6, %s138
    %s140 = sld [smem:[#allocation4]]
    %s141 = smul.u32 16, %s140
    %s142 = sld [smem:[#allocation5]]
    %p143 = scmp.lt.s32.totalorder %s142, 0
    %s144 = scalar_select %p143, %s142, 0
    %s145 = scalar_lea.vmem %s7, %s144
    %s146 = sld [smem:[#allocation5]]
    %s147 = sld [smem:[#allocation4]]
    %s148 = sld [smem:[#allocation5]]
    %s149 = smul.u32 16, %s147
    %s150 = sld [smem:[#allocation4]]
    %s151 = sld [smem:[#allocation4]]
    %s152 = sld [smem:[#allocation5]]
    %p153 = scmp.eq.s32.totalorder 0, 0
    // Predicated region
    $region26: #{tpu_custom_call.1} parent=1 // pred_check
      %p154 = pneg %p153
    $region27: #{tpu_custom_call.1} parent=1 // pred_check_branch
      %156 = sbr.rel (%p154) target = $region29
    $region28: #{tpu_custom_call.1} parent=1 // pred_region
      %157 = vst [vmem:[#allocation2] sm:$0xff] 0.0
      %158 = vst [vmem:[#allocation2 + $0x8] sm:$0xff] 0.0
      %159 = vst [vmem:[#allocation2 + $0x10] sm:$0xff] 0.0
      %160 = vst [vmem:[#allocation2 + $0x18] sm:$0xff] 0.0
      %161 = vst [vmem:[#allocation2 + $0x20] sm:$0xff] 0.0
      %162 = vst [vmem:[#allocation2 + $0x28] sm:$0xff] 0.0
      %163 = vst [vmem:[#allocation2 + $0x30] sm:$0xff] 0.0
      %164 = vst [vmem:[#allocation2 + $0x38] sm:$0xff] 0.0
      %165 = vst [vmem:[#allocation2 + $0x40] sm:$0xff] 0.0
      %166 = vst [vmem:[#allocation2 + $0x48] sm:$0xff] 0.0
      %167 = vst [vmem:[#allocation2 + $0x50] sm:$0xff] 0.0
      %168 = vst [vmem:[#allocation2 + $0x58] sm:$0xff] 0.0
      %169 = vst [vmem:[#allocation2 + $0x60] sm:$0xff] 0.0
      %170 = vst [vmem:[#allocation2 + $0x68] sm:$0xff] 0.0
      %171 = vst [vmem:[#allocation2 + $0x70] sm:$0xff] 0.0
      %172 = vst [vmem:[#allocation2 + $0x78] sm:$0xff] 0.0
    $region29: #{tpu_custom_call.1} parent=1 // pred_fallthru
      _
    %v173 = vld [vmem:[#allocation2] sm:$0xff]
    %v174 = vld [vmem:[#allocation2 + $0x8] sm:$0xff]
    %v175 = vld [vmem:[#allocation2 + $0x10] sm:$0xff]
    %v176 = vld [vmem:[#allocation2 + $0x18] sm:$0xff]
    %v177 = vld [vmem:[#allocation2 + $0x20] sm:$0xff]
    %v178 = vld [vmem:[#allocation2 + $0x28] sm:$0xff]
    %v179 = vld [vmem:[#allocation2 + $0x30] sm:$0xff]
    %v180 = vld [vmem:[#allocation2 + $0x38] sm:$0xff]
    %v181 = vld [vmem:[#allocation2 + $0x40] sm:$0xff]
    %v182 = vld [vmem:[#allocation2 + $0x48] sm:$0xff]
    %v183 = vld [vmem:[#allocation2 + $0x50] sm:$0xff]
    %v184 = vld [vmem:[#allocation2 + $0x58] sm:$0xff]
    %v185 = vld [vmem:[#allocation2 + $0x60] sm:$0xff]
    %v186 = vld [vmem:[#allocation2 + $0x68] sm:$0xff]
    %v187 = vld [vmem:[#allocation2 + $0x70] sm:$0xff]
    %v188 = vld [vmem:[#allocation2 + $0x78] sm:$0xff]
    %v189 = vld [vmem:[%s110] sm:$0xff]
    %v190 = vld [vmem:[%s110 + $0x8] sm:$0xff]
    %v191 = vld [vmem:[%s110 + $0x10] sm:$0xff]
    %v192 = vld [vmem:[%s110 + $0x18] sm:$0xff]
    %v193 = vld [vmem:[%s110 + $0x20] sm:$0xff]
    %v194 = vld [vmem:[%s110 + $0x28] sm:$0xff]
    %v195 = vld [vmem:[%s110 + $0x30] sm:$0xff]
    %v196 = vld [vmem:[%s110 + $0x38] sm:$0xff]
    %v197 = vld [vmem:[%s110 + $0x40] sm:$0xff]
    %v198 = vld [vmem:[%s110 + $0x48] sm:$0xff]
    %v199 = vld [vmem:[%s110 + $0x50] sm:$0xff]
    %v200 = vld [vmem:[%s110 + $0x58] sm:$0xff]
    %v201 = vld [vmem:[%s110 + $0x60] sm:$0xff]
    %v202 = vld [vmem:[%s110 + $0x68] sm:$0xff]
    %v203 = vld [vmem:[%s110 + $0x70] sm:$0xff]
    %v204 = vld [vmem:[%s110 + $0x78] sm:$0xff]
    %v205 = vld [vmem:[%s118] sm:$0xff]
    %v206 = vld [vmem:[%s118 + $0x8] sm:$0xff]
    %v207 = vld [vmem:[%s118 + $0x10] sm:$0xff]
    %v208 = vld [vmem:[%s118 + $0x18] sm:$0xff]
    %v209 = vld [vmem:[%s118 + $0x20] sm:$0xff]
    %v210 = vld [vmem:[%s118 + $0x28] sm:$0xff]
    %v211 = vld [vmem:[%s118 + $0x30] sm:$0xff]
    %v212 = vld [vmem:[%s118 + $0x38] sm:$0xff]
    %v213 = vld [vmem:[%s118 + $0x40] sm:$0xff]
    %v214 = vld [vmem:[%s118 + $0x48] sm:$0xff]
    %v215 = vld [vmem:[%s118 + $0x50] sm:$0xff]
    %v216 = vld [vmem:[%s118 + $0x58] sm:$0xff]
    %v217 = vld [vmem:[%s118 + $0x60] sm:$0xff]
    %v218 = vld [vmem:[%s118 + $0x68] sm:$0xff]
    %v219 = vld [vmem:[%s118 + $0x70] sm:$0xff]
    %v220 = vld [vmem:[%s118 + $0x78] sm:$0xff]
    %vm221 = vcmask 261120
    %v223 = vsel %vm221, %v189, 0
    %v226 = vsel %vm221, %v190, 0
    %v229 = vsel %vm221, %v191, 0
    %v232 = vsel %vm221, %v192, 0
    %v235 = vsel %vm221, %v193, 0
    %v238 = vsel %vm221, %v194, 0
    %v241 = vsel %vm221, %v195, 0
    %v244 = vsel %vm221, %v196, 0
    %v247 = vsel %vm221, %v197, 0
    %v250 = vsel %vm221, %v198, 0
    %v253 = vsel %vm221, %v199, 0
    %v256 = vsel %vm221, %v200, 0
    %v259 = vsel %vm221, %v201, 0
    %v262 = vsel %vm221, %v202, 0
    %v265 = vsel %vm221, %v203, 0
    %v268 = vsel %vm221, %v204, 0
    %v271 = vsel %vm221, %v205, 0
    %v274 = vsel %vm221, %v206, 0
    %v277 = vsel %vm221, %v207, 0
    %v280 = vsel %vm221, %v208, 0
    %v283 = vsel %vm221, %v209, 0
    %v286 = vsel %vm221, %v210, 0
    %v289 = vsel %vm221, %v211, 0
    %v292 = vsel %vm221, %v212, 0
    %v295 = vsel %vm221, %v213, 0
    %v298 = vsel %vm221, %v214, 0
    %v301 = vsel %vm221, %v215, 0
    %v304 = vsel %vm221, %v216, 0
    %v307 = vsel %vm221, %v217, 0
    %v310 = vsel %vm221, %v218, 0
    %v313 = vsel %vm221, %v219, 0
    %v316 = vsel %vm221, %v220, 0
    %318 = vmatpush.xpose.msra.mxu0 %v316
    %319 = vmatpush.xpose.msra.mxu0 %v313
    %320 = vmatpush.xpose.msra.mxu0 %v310
    %321 = vmatpush.xpose.msra.mxu0 %v307
    %322 = vmatpush.xpose.msra.mxu0 %v304
    %323 = vmatpush.xpose.msra.mxu0 %v301
    %324 = vmatpush.xpose.msra.mxu0 %v298
    %325 = vmatpush.xpose.msra.mxu0 %v295
    %326 = vmatpush.xpose.msra.mxu0 %v292
    %327 = vmatpush.xpose.msra.mxu0 %v289
    %328 = vmatpush.xpose.msra.mxu0 %v286
    %329 = vmatpush.xpose.msra.mxu0 %v283
    %330 = vmatpush.xpose.msra.mxu0 %v280
    %331 = vmatpush.xpose.msra.mxu0 %v277
    %332 = vmatpush.xpose.msra.mxu0 %v274
    %333 = vmatpush.xpose.msra.mxu0 %v271
    %334 = vmatmul.f32.gmra.mxu0 %v223
    %v335 = vpop.f32.mrf.mxu0
    %v336 = vadd.f32 0.0, %v335
    %337 = vmatmul.f32.gmra.mxu0 %v226
    %v338 = vpop.f32.mrf.mxu0
    %v339 = vadd.f32 0.0, %v338
    %340 = vmatmul.f32.gmra.mxu0 %v229
    %v341 = vpop.f32.mrf.mxu0
    %v342 = vadd.f32 0.0, %v341
    %343 = vmatmul.f32.gmra.mxu0 %v232
    %v344 = vpop.f32.mrf.mxu0
    %v345 = vadd.f32 0.0, %v344
    %346 = vmatmul.f32.gmra.mxu0 %v235
    %v347 = vpop.f32.mrf.mxu0
    %v348 = vadd.f32 0.0, %v347
    %349 = vmatmul.f32.gmra.mxu0 %v238
    %v350 = vpop.f32.mrf.mxu0
    %v351 = vadd.f32 0.0, %v350
    %352 = vmatmul.f32.gmra.mxu0 %v241
    %v353 = vpop.f32.mrf.mxu0
    %v354 = vadd.f32 0.0, %v353
    %355 = vmatmul.f32.gmra.mxu0 %v244
    %v356 = vpop.f32.mrf.mxu0
    %v357 = vadd.f32 0.0, %v356
    %358 = vmatmul.f32.gmra.mxu0 %v247
    %v359 = vpop.f32.mrf.mxu0
    %v360 = vadd.f32 0.0, %v359
    %361 = vmatmul.f32.gmra.mxu0 %v250
    %v362 = vpop.f32.mrf.mxu0
    %v363 = vadd.f32 0.0, %v362
    %364 = vmatmul.f32.gmra.mxu0 %v253
    %v365 = vpop.f32.mrf.mxu0
    %v366 = vadd.f32 0.0, %v365
    %367 = vmatmul.f32.gmra.mxu0 %v256
    %v368 = vpop.f32.mrf.mxu0
    %v369 = vadd.f32 0.0, %v368
    %370 = vmatmul.f32.gmra.mxu0 %v259
    %v371 = vpop.f32.mrf.mxu0
    %v372 = vadd.f32 0.0, %v371
    %373 = vmatmul.f32.gmra.mxu0 %v262
    %v374 = vpop.f32.mrf.mxu0
    %v375 = vadd.f32 0.0, %v374
    %376 = vmatmul.f32.gmra.mxu0 %v265
    %v377 = vpop.f32.mrf.mxu0
    %v378 = vadd.f32 0.0, %v377
    %379 = vmatmul.f32.gmra.mxu0 %v268
    %v380 = vpop.f32.mrf.mxu0
    %v381 = vadd.f32 0.0, %v380
    %382 = vdwg.mxu0
    %v383 = vadd.f32 %v173, %v336
    %v384 = vadd.f32 %v174, %v339
    %v385 = vadd.f32 %v175, %v342
    %v386 = vadd.f32 %v176, %v345
    %v387 = vadd.f32 %v177, %v348
    %v388 = vadd.f32 %v178, %v351
    %v389 = vadd.f32 %v179, %v354
    %v390 = vadd.f32 %v180, %v357
    %v391 = vadd.f32 %v181, %v360
    %v392 = vadd.f32 %v182, %v363
    %v393 = vadd.f32 %v183, %v366
    %v394 = vadd.f32 %v184, %v369
    %v395 = vadd.f32 %v185, %v372
    %v396 = vadd.f32 %v186, %v375
    %v397 = vadd.f32 %v187, %v378
    %v398 = vadd.f32 %v188, %v381
    %399 = vst [vmem:[#allocation2] sm:$0xff] %v383
    %400 = vst [vmem:[#allocation2 + $0x8] sm:$0xff] %v384
    %401 = vst [vmem:[#allocation2 + $0x10] sm:$0xff] %v385
    %402 = vst [vmem:[#allocation2 + $0x18] sm:$0xff] %v386
    %403 = vst [vmem:[#allocation2 + $0x20] sm:$0xff] %v387
    %404 = vst [vmem:[#allocation2 + $0x28] sm:$0xff] %v388
    %405 = vst [vmem:[#allocation2 + $0x30] sm:$0xff] %v389
    %406 = vst [vmem:[#allocation2 + $0x38] sm:$0xff] %v390
    %407 = vst [vmem:[#allocation2 + $0x40] sm:$0xff] %v391
    %408 = vst [vmem:[#allocation2 + $0x48] sm:$0xff] %v392
    %409 = vst [vmem:[#allocation2 + $0x50] sm:$0xff] %v393
    %410 = vst [vmem:[#allocation2 + $0x58] sm:$0xff] %v394
    %411 = vst [vmem:[#allocation2 + $0x60] sm:$0xff] %v395
    %412 = vst [vmem:[#allocation2 + $0x68] sm:$0xff] %v396
    %413 = vst [vmem:[#allocation2 + $0x70] sm:$0xff] %v397
    %414 = vst [vmem:[#allocation2 + $0x78] sm:$0xff] %v398
    // Predicated region
    $region30: #{tpu_custom_call.1} parent=1 // pred_check
      %p415 = pneg %p153
    $region31: #{tpu_custom_call.1} parent=1 // pred_check_branch
      %417 = sbr.rel (%p415) target = $region33
    $region32: #{tpu_custom_call.1} parent=1 // pred_region
      %v418 = vld [vmem:[#allocation2] sm:$0xff]
      %v419 = vld [vmem:[#allocation2 + $0x8] sm:$0xff]
      %v420 = vld [vmem:[#allocation2 + $0x10] sm:$0xff]
      %v421 = vld [vmem:[#allocation2 + $0x18] sm:$0xff]
      %v422 = vld [vmem:[#allocation2 + $0x20] sm:$0xff]
      %v423 = vld [vmem:[#allocation2 + $0x28] sm:$0xff]
      %v424 = vld [vmem:[#allocation2 + $0x30] sm:$0xff]
      %v425 = vld [vmem:[#allocation2 + $0x38] sm:$0xff]
      %v426 = vld [vmem:[#allocation2 + $0x40] sm:$0xff]
      %v427 = vld [vmem:[#allocation2 + $0x48] sm:$0xff]
      %v428 = vld [vmem:[#allocation2 + $0x50] sm:$0xff]
      %v429 = vld [vmem:[#allocation2 + $0x58] sm:$0xff]
      %v430 = vld [vmem:[#allocation2 + $0x60] sm:$0xff]
      %v431 = vld [vmem:[#allocation2 + $0x68] sm:$0xff]
      %v432 = vld [vmem:[#allocation2 + $0x70] sm:$0xff]
      %v433 = vld [vmem:[#allocation2 + $0x78] sm:$0xff]
      %v434 = vld [vmem:[%s126] sm:$0xff]
      %v435 = vld [vmem:[%s126 + $0x8] sm:$0xff]
      %v436 = vld [vmem:[%s126 + $0x10] sm:$0xff]
      %v437 = vld [vmem:[%s126 + $0x18] sm:$0xff]
      %v438 = vld [vmem:[%s126 + $0x20] sm:$0xff]
      %v439 = vld [vmem:[%s126 + $0x28] sm:$0xff]
      %v440 = vld [vmem:[%s126 + $0x30] sm:$0xff]
      %v441 = vld [vmem:[%s126 + $0x38] sm:$0xff]
      %v442 = vld [vmem:[%s126 + $0x40] sm:$0xff]
      %v443 = vld [vmem:[%s126 + $0x48] sm:$0xff]
      %v444 = vld [vmem:[%s126 + $0x50] sm:$0xff]
      %v445 = vld [vmem:[%s126 + $0x58] sm:$0xff]
      %v446 = vld [vmem:[%s126 + $0x60] sm:$0xff]
      %v447 = vld [vmem:[%s126 + $0x68] sm:$0xff]
      %v448 = vld [vmem:[%s126 + $0x70] sm:$0xff]
      %v449 = vld [vmem:[%s126 + $0x78] sm:$0xff]
      %v450 = vld [vmem:[%s132] sm:$0x1]
      %452 = vset.pattern.permute.xlu0 0
      %453 = vperm.xlu0 %452, %v434
      %v454 = vpop.permute.xlu0 %453
      %457 = vset.pattern.permute.xlu0 0
      %458 = vperm.xlu0 %457, %v435
      %v459 = vpop.permute.xlu0 %458
      %462 = vset.pattern.permute.xlu0 0
      %463 = vperm.xlu0 %462, %v436
      %v464 = vpop.permute.xlu0 %463
      %467 = vset.pattern.permute.xlu0 0
      %468 = vperm.xlu0 %467, %v437
      %v469 = vpop.permute.xlu0 %468
      %472 = vset.pattern.permute.xlu0 0
      %473 = vperm.xlu0 %472, %v438
      %v474 = vpop.permute.xlu0 %473
      %477 = vset.pattern.permute.xlu0 0
      %478 = vperm.xlu0 %477, %v439
      %v479 = vpop.permute.xlu0 %478
      %482 = vset.pattern.permute.xlu0 0
      %483 = vperm.xlu0 %482, %v440
      %v484 = vpop.permute.xlu0 %483
      %487 = vset.pattern.permute.xlu0 0
      %488 = vperm.xlu0 %487, %v441
      %v489 = vpop.permute.xlu0 %488
      %492 = vset.pattern.permute.xlu0 0
      %493 = vperm.xlu0 %492, %v442
      %v494 = vpop.permute.xlu0 %493
      %497 = vset.pattern.permute.xlu0 0
      %498 = vperm.xlu0 %497, %v443
      %v499 = vpop.permute.xlu0 %498
      %502 = vset.pattern.permute.xlu0 0
      %503 = vperm.xlu0 %502, %v444
      %v504 = vpop.permute.xlu0 %503
      %507 = vset.pattern.permute.xlu0 0
      %508 = vperm.xlu0 %507, %v445
      %v509 = vpop.permute.xlu0 %508
      %512 = vset.pattern.permute.xlu0 0
      %513 = vperm.xlu0 %512, %v446
      %v514 = vpop.permute.xlu0 %513
      %517 = vset.pattern.permute.xlu0 0
      %518 = vperm.xlu0 %517, %v447
      %v519 = vpop.permute.xlu0 %518
      %522 = vset.pattern.permute.xlu0 0
      %523 = vperm.xlu0 %522, %v448
      %v524 = vpop.permute.xlu0 %523
      %527 = vset.pattern.permute.xlu0 0
      %528 = vperm.xlu0 %527, %v449
      %v529 = vpop.permute.xlu0 %528
      %v532 = vperm.slane %v450, 0
      %v534 = vadd.f32 %v454, %v532
      %v535 = vadd.f32 %v459, %v532
      %v536 = vadd.f32 %v464, %v532
      %v537 = vadd.f32 %v469, %v532
      %v538 = vadd.f32 %v474, %v532
      %v539 = vadd.f32 %v479, %v532
      %v540 = vadd.f32 %v484, %v532
      %v541 = vadd.f32 %v489, %v532
      %v542 = vadd.f32 %v494, %v532
      %v543 = vadd.f32 %v499, %v532
      %v544 = vadd.f32 %v504, %v532
      %v545 = vadd.f32 %v509, %v532
      %v546 = vadd.f32 %v514, %v532
      %v547 = vadd.f32 %v519, %v532
      %v548 = vadd.f32 %v524, %v532
      %v549 = vadd.f32 %v529, %v532
      %v550 = vmul.f32 %v418, 2.0
      %v551 = vmul.f32 %v419, 2.0
      %v552 = vmul.f32 %v420, 2.0
      %v553 = vmul.f32 %v421, 2.0
      %v554 = vmul.f32 %v422, 2.0
      %v555 = vmul.f32 %v423, 2.0
      %v556 = vmul.f32 %v424, 2.0
      %v557 = vmul.f32 %v425, 2.0
      %v558 = vmul.f32 %v426, 2.0
      %v559 = vmul.f32 %v427, 2.0
      %v560 = vmul.f32 %v428, 2.0
      %v561 = vmul.f32 %v429, 2.0
      %v562 = vmul.f32 %v430, 2.0
      %v563 = vmul.f32 %v431, 2.0
      %v564 = vmul.f32 %v432, 2.0
      %v565 = vmul.f32 %v433, 2.0
      %v566 = vsub.f32 %v534, %v550
      %v567 = vsub.f32 %v535, %v551
      %v568 = vsub.f32 %v536, %v552
      %v569 = vsub.f32 %v537, %v553
      %v570 = vsub.f32 %v538, %v554
      %v571 = vsub.f32 %v539, %v555
      %v572 = vsub.f32 %v540, %v556
      %v573 = vsub.f32 %v541, %v557
      %v574 = vsub.f32 %v542, %v558
      %v575 = vsub.f32 %v543, %v559
      %v576 = vsub.f32 %v544, %v560
      %v577 = vsub.f32 %v545, %v561
      %v578 = vsub.f32 %v546, %v562
      %v579 = vsub.f32 %v547, %v563
      %v580 = vsub.f32 %v548, %v564
      %v581 = vsub.f32 %v549, %v565
      %v582 = vmax.f32 %v566, 0.0
      %v583 = vmax.f32 %v567, 0.0
      %v584 = vmax.f32 %v568, 0.0
      %v585 = vmax.f32 %v569, 0.0
      %v586 = vmax.f32 %v570, 0.0
      %v587 = vmax.f32 %v571, 0.0
      %v588 = vmax.f32 %v572, 0.0
      %v589 = vmax.f32 %v573, 0.0
      %v590 = vmax.f32 %v574, 0.0
      %v591 = vmax.f32 %v575, 0.0
      %v592 = vmax.f32 %v576, 0.0
      %v593 = vmax.f32 %v577, 0.0
      %v594 = vmax.f32 %v578, 0.0
      %v595 = vmax.f32 %v579, 0.0
      %v596 = vmax.f32 %v580, 0.0
      %v597 = vmax.f32 %v581, 0.0
      %v598 = vrsqrt.pop %v582
      %v599 = vmul.f32 %v598, %v582
      %v600 = vmul.f32 %v599, %v598
      %v601 = vmul.f32 0.5, %v600
      %v602 = vsub.f32 1.5, %v601
      %v603 = vmul.f32 %v598, %v602
      %v604 = vmul.f32 %v582, %v603
      %vm605 = vcmp.eq.f32.partialorder %v582, inf
      %v606 = vsel %vm605, %v582, %v604
      %vm607 = vcmp.eq.f32.partialorder %v582, 0.0
      %v608 = vand.u32 %v582, 2147483648
      %v609 = vsel %vm607, %v608, %v606
      %v610 = vrsqrt.pop %v583
      %v611 = vmul.f32 %v610, %v583
      %v612 = vmul.f32 %v611, %v610
      %v613 = vmul.f32 0.5, %v612
      %v614 = vsub.f32 1.5, %v613
      %v615 = vmul.f32 %v610, %v614
      %v616 = vmul.f32 %v583, %v615
      %vm617 = vcmp.eq.f32.partialorder %v583, inf
      %v618 = vsel %vm617, %v583, %v616
      %vm619 = vcmp.eq.f32.partialorder %v583, 0.0
      %v620 = vand.u32 %v583, 2147483648
      %v621 = vsel %vm619, %v620, %v618
      %v622 = vrsqrt.pop %v584
      %v623 = vmul.f32 %v622, %v584
      %v624 = vmul.f32 %v623, %v622
      %v625 = vmul.f32 0.5, %v624
      %v626 = vsub.f32 1.5, %v625
      %v627 = vmul.f32 %v622, %v626
      %v628 = vmul.f32 %v584, %v627
      %vm629 = vcmp.eq.f32.partialorder %v584, inf
      %v630 = vsel %vm629, %v584, %v628
      %vm631 = vcmp.eq.f32.partialorder %v584, 0.0
      %v632 = vand.u32 %v584, 2147483648
      %v633 = vsel %vm631, %v632, %v630
      %v634 = vrsqrt.pop %v585
      %v635 = vmul.f32 %v634, %v585
      %v636 = vmul.f32 %v635, %v634
      %v637 = vmul.f32 0.5, %v636
      %v638 = vsub.f32 1.5, %v637
      %v639 = vmul.f32 %v634, %v638
      %v640 = vmul.f32 %v585, %v639
      %vm641 = vcmp.eq.f32.partialorder %v585, inf
      %v642 = vsel %vm641, %v585, %v640
      %vm643 = vcmp.eq.f32.partialorder %v585, 0.0
      %v644 = vand.u32 %v585, 2147483648
      %v645 = vsel %vm643, %v644, %v642
      %v646 = vrsqrt.pop %v586
      %v647 = vmul.f32 %v646, %v586
      %v648 = vmul.f32 %v647, %v646
      %v649 = vmul.f32 0.5, %v648
      %v650 = vsub.f32 1.5, %v649
      %v651 = vmul.f32 %v646, %v650
      %v652 = vmul.f32 %v586, %v651
      %vm653 = vcmp.eq.f32.partialorder %v586, inf
      %v654 = vsel %vm653, %v586, %v652
      %vm655 = vcmp.eq.f32.partialorder %v586, 0.0
      %v656 = vand.u32 %v586, 2147483648
      %v657 = vsel %vm655, %v656, %v654
      %v658 = vrsqrt.pop %v587
      %v659 = vmul.f32 %v658, %v587
      %v660 = vmul.f32 %v659, %v658
      %v661 = vmul.f32 0.5, %v660
      %v662 = vsub.f32 1.5, %v661
      %v663 = vmul.f32 %v658, %v662
      %v664 = vmul.f32 %v587, %v663
      %vm665 = vcmp.eq.f32.partialorder %v587, inf
      %v666 = vsel %vm665, %v587, %v664
      %vm667 = vcmp.eq.f32.partialorder %v587, 0.0
      %v668 = vand.u32 %v587, 2147483648
      %v669 = vsel %vm667, %v668, %v666
      %v670 = vrsqrt.pop %v588
      %v671 = vmul.f32 %v670, %v588
      %v672 = vmul.f32 %v671, %v670
      %v673 = vmul.f32 0.5, %v672
      %v674 = vsub.f32 1.5, %v673
      %v675 = vmul.f32 %v670, %v674
      %v676 = vmul.f32 %v588, %v675
      %vm677 = vcmp.eq.f32.partialorder %v588, inf
      %v678 = vsel %vm677, %v588, %v676
      %vm679 = vcmp.eq.f32.partialorder %v588, 0.0
      %v680 = vand.u32 %v588, 2147483648
      %v681 = vsel %vm679, %v680, %v678
      %v682 = vrsqrt.pop %v589
      %v683 = vmul.f32 %v682, %v589
      %v684 = vmul.f32 %v683, %v682
      %v685 = vmul.f32 0.5, %v684
      %v686 = vsub.f32 1.5, %v685
      %v687 = vmul.f32 %v682, %v686
      %v688 = vmul.f32 %v589, %v687
      %vm689 = vcmp.eq.f32.partialorder %v589, inf
      %v690 = vsel %vm689, %v589, %v688
      %vm691 = vcmp.eq.f32.partialorder %v589, 0.0
      %v692 = vand.u32 %v589, 2147483648
      %v693 = vsel %vm691, %v692, %v690
      %v694 = vrsqrt.pop %v590
      %v695 = vmul.f32 %v694, %v590
      %v696 = vmul.f32 %v695, %v694
      %v697 = vmul.f32 0.5, %v696
      %v698 = vsub.f32 1.5, %v697
      %v699 = vmul.f32 %v694, %v698
      %v700 = vmul.f32 %v590, %v699
      %vm701 = vcmp.eq.f32.partialorder %v590, inf
      %v702 = vsel %vm701, %v590, %v700
      %vm703 = vcmp.eq.f32.partialorder %v590, 0.0
      %v704 = vand.u32 %v590, 2147483648
      %v705 = vsel %vm703, %v704, %v702
      %v706 = vrsqrt.pop %v591
      %v707 = vmul.f32 %v706, %v591
      %v708 = vmul.f32 %v707, %v706
      %v709 = vmul.f32 0.5, %v708
      %v710 = vsub.f32 1.5, %v709
      %v711 = vmul.f32 %v706, %v710
      %v712 = vmul.f32 %v591, %v711
      %vm713 = vcmp.eq.f32.partialorder %v591, inf
      %v714 = vsel %vm713, %v591, %v712
      %vm715 = vcmp.eq.f32.partialorder %v591, 0.0
      %v716 = vand.u32 %v591, 2147483648
      %v717 = vsel %vm715, %v716, %v714
      %v718 = vrsqrt.pop %v592
      %v719 = vmul.f32 %v718, %v592
      %v720 = vmul.f32 %v719, %v718
      %v721 = vmul.f32 0.5, %v720
      %v722 = vsub.f32 1.5, %v721
      %v723 = vmul.f32 %v718, %v722
      %v724 = vmul.f32 %v592, %v723
      %vm725 = vcmp.eq.f32.partialorder %v592, inf
      %v726 = vsel %vm725, %v592, %v724
      %vm727 = vcmp.eq.f32.partialorder %v592, 0.0
      %v728 = vand.u32 %v592, 2147483648
      %v729 = vsel %vm727, %v728, %v726
      %v730 = vrsqrt.pop %v593
      %v731 = vmul.f32 %v730, %v593
      %v732 = vmul.f32 %v731, %v730
      %v733 = vmul.f32 0.5, %v732
      %v734 = vsub.f32 1.5, %v733
      %v735 = vmul.f32 %v730, %v734
      %v736 = vmul.f32 %v593, %v735
      %vm737 = vcmp.eq.f32.partialorder %v593, inf
      %v738 = vsel %vm737, %v593, %v736
      %vm739 = vcmp.eq.f32.partialorder %v593, 0.0
      %v740 = vand.u32 %v593, 2147483648
      %v741 = vsel %vm739, %v740, %v738
      %v742 = vrsqrt.pop %v594
      %v743 = vmul.f32 %v742, %v594
      %v744 = vmul.f32 %v743, %v742
      %v745 = vmul.f32 0.5, %v744
      %v746 = vsub.f32 1.5, %v745
      %v747 = vmul.f32 %v742, %v746
      %v748 = vmul.f32 %v594, %v747
      %vm749 = vcmp.eq.f32.partialorder %v594, inf
      %v750 = vsel %vm749, %v594, %v748
      %vm751 = vcmp.eq.f32.partialorder %v594, 0.0
      %v752 = vand.u32 %v594, 2147483648
      %v753 = vsel %vm751, %v752, %v750
      %v754 = vrsqrt.pop %v595
      %v755 = vmul.f32 %v754, %v595
      %v756 = vmul.f32 %v755, %v754
      %v757 = vmul.f32 0.5, %v756
      %v758 = vsub.f32 1.5, %v757
      %v759 = vmul.f32 %v754, %v758
      %v760 = vmul.f32 %v595, %v759
      %vm761 = vcmp.eq.f32.partialorder %v595, inf
      %v762 = vsel %vm761, %v595, %v760
      %vm763 = vcmp.eq.f32.partialorder %v595, 0.0
      %v764 = vand.u32 %v595, 2147483648
      %v765 = vsel %vm763, %v764, %v762
      %v766 = vrsqrt.pop %v596
      %v767 = vmul.f32 %v766, %v596
      %v768 = vmul.f32 %v767, %v766
      %v769 = vmul.f32 0.5, %v768
      %v770 = vsub.f32 1.5, %v769
      %v771 = vmul.f32 %v766, %v770
      %v772 = vmul.f32 %v596, %v771
      %vm773 = vcmp.eq.f32.partialorder %v596, inf
      %v774 = vsel %vm773, %v596, %v772
      %vm775 = vcmp.eq.f32.partialorder %v596, 0.0
      %v776 = vand.u32 %v596, 2147483648
      %v777 = vsel %vm775, %v776, %v774
      %v778 = vrsqrt.pop %v597
      %v779 = vmul.f32 %v778, %v597
      %v780 = vmul.f32 %v779, %v778
      %v781 = vmul.f32 0.5, %v780
      %v782 = vsub.f32 1.5, %v781
      %v783 = vmul.f32 %v778, %v782
      %v784 = vmul.f32 %v597, %v783
      %vm785 = vcmp.eq.f32.partialorder %v597, inf
      %v786 = vsel %vm785, %v597, %v784
      %vm787 = vcmp.eq.f32.partialorder %v597, 0.0
      %v788 = vand.u32 %v597, 2147483648
      %v789 = vsel %vm787, %v788, %v786
      %790 = vst [vmem:[#allocation6] sm:$0xff] %v609
      %791 = vst [vmem:[#allocation6 + $0x8] sm:$0xff] %v621
      %792 = vst [vmem:[#allocation6 + $0x10] sm:$0xff] %v633
      %793 = vst [vmem:[#allocation6 + $0x18] sm:$0xff] %v645
      %794 = vst [vmem:[#allocation6 + $0x20] sm:$0xff] %v657
      %795 = vst [vmem:[#allocation6 + $0x28] sm:$0xff] %v669
      %796 = vst [vmem:[#allocation6 + $0x30] sm:$0xff] %v681
      %797 = vst [vmem:[#allocation6 + $0x38] sm:$0xff] %v693
      %798 = vst [vmem:[#allocation6 + $0x40] sm:$0xff] %v705
      %799 = vst [vmem:[#allocation6 + $0x48] sm:$0xff] %v717
      %800 = vst [vmem:[#allocation6 + $0x50] sm:$0xff] %v729
      %801 = vst [vmem:[#allocation6 + $0x58] sm:$0xff] %v741
      %802 = vst [vmem:[#allocation6 + $0x60] sm:$0xff] %v753
      %803 = vst [vmem:[#allocation6 + $0x68] sm:$0xff] %v765
      %804 = vst [vmem:[#allocation6 + $0x70] sm:$0xff] %v777
      %805 = vst [vmem:[#allocation6 + $0x78] sm:$0xff] %v789
      %v806 = vld [vmem:[%s139] sm:$0xff]
      %v807 = vld [vmem:[%s139 + $0x8] sm:$0xff]
      %v808 = vld [vmem:[%s139 + $0x10] sm:$0xff]
      %v809 = vld [vmem:[%s139 + $0x18] sm:$0xff]
      %v810 = vld [vmem:[%s139 + $0x20] sm:$0xff]
      %v811 = vld [vmem:[%s139 + $0x28] sm:$0xff]
      %v812 = vld [vmem:[%s139 + $0x30] sm:$0xff]
      %v813 = vld [vmem:[%s139 + $0x38] sm:$0xff]
      %v814 = vld [vmem:[%s139 + $0x40] sm:$0xff]
      %v815 = vld [vmem:[%s139 + $0x48] sm:$0xff]
      %v816 = vld [vmem:[%s139 + $0x50] sm:$0xff]
      %v817 = vld [vmem:[%s139 + $0x58] sm:$0xff]
      %v818 = vld [vmem:[%s139 + $0x60] sm:$0xff]
      %v819 = vld [vmem:[%s139 + $0x68] sm:$0xff]
      %v820 = vld [vmem:[%s139 + $0x70] sm:$0xff]
      %v821 = vld [vmem:[%s139 + $0x78] sm:$0xff]
      %v822 = vld [vmem:[%s145] sm:$0x1]
      %s823 = smul.u32 %s151, 128
      %v824 = vlaneseq
      %v825 = vshrl.u32 %v824, 7
      %v826 = vadd.s32 %v825, 8
      %v827 = vadd.s32 %v825, 16
      %v828 = vadd.s32 %v825, 24
      %v829 = vadd.s32 %v825, 32
      %v830 = vadd.s32 %v825, 40
      %v831 = vadd.s32 %v825, 48
      %v832 = vadd.s32 %v825, 56
      %v833 = vadd.s32 %v825, 64
      %v834 = vadd.s32 %v825, 72
      %v835 = vadd.s32 %v825, 80
      %v836 = vadd.s32 %v825, 88
      %v837 = vadd.s32 %v825, 96
      %v838 = vadd.s32 %v825, 104
      %v839 = vadd.s32 %v825, 112
      %v840 = vadd.s32 %v825, 120
      %v841 = vstv %s823
      %v842 = vadd.s32 %v841, %v825
      %v843 = vadd.s32 %v841, %v826
      %v844 = vadd.s32 %v841, %v827
      %v845 = vadd.s32 %v841, %v828
      %v846 = vadd.s32 %v841, %v829
      %v847 = vadd.s32 %v841, %v830
      %v848 = vadd.s32 %v841, %v831
      %v849 = vadd.s32 %v841, %v832
      %v850 = vadd.s32 %v841, %v833
      %v851 = vadd.s32 %v841, %v834
      %v852 = vadd.s32 %v841, %v835
      %v853 = vadd.s32 %v841, %v836
      %v854 = vadd.s32 %v841, %v837
      %v855 = vadd.s32 %v841, %v838
      %v856 = vadd.s32 %v841, %v839
      %v857 = vadd.s32 %v841, %v840
      %s858 = smul.u32 %s152, 128
      %v859 = vlaneseq
      %v860 = vand.u32 %v859, 127
      %v861 = vstv %s858
      %v862 = vadd.s32 %v861, %v860
      %vm863 = vcmp.lt.s32.totalorder %v842, %v862
      %vm864 = vcmp.lt.s32.totalorder %v843, %v862
      %vm865 = vcmp.lt.s32.totalorder %v844, %v862
      %vm866 = vcmp.lt.s32.totalorder %v845, %v862
      %vm867 = vcmp.lt.s32.totalorder %v846, %v862
      %vm868 = vcmp.lt.s32.totalorder %v847, %v862
      %vm869 = vcmp.lt.s32.totalorder %v848, %v862
      %vm870 = vcmp.lt.s32.totalorder %v849, %v862
      %vm871 = vcmp.lt.s32.totalorder %v850, %v862
      %vm872 = vcmp.lt.s32.totalorder %v851, %v862
      %vm873 = vcmp.lt.s32.totalorder %v852, %v862
      %vm874 = vcmp.lt.s32.totalorder %v853, %v862
      %vm875 = vcmp.lt.s32.totalorder %v854, %v862
      %vm876 = vcmp.lt.s32.totalorder %v855, %v862
      %vm877 = vcmp.lt.s32.totalorder %v856, %v862
      %vm878 = vcmp.lt.s32.totalorder %v857, %v862
      %vm879 = vcmp.lt.s32.totalorder %v842, 8
      %vm880 = vcmp.lt.s32.totalorder %v843, 8
      %vm881 = vcmp.lt.s32.totalorder %v844, 8
      %vm882 = vcmp.lt.s32.totalorder %v845, 8
      %vm883 = vcmp.lt.s32.totalorder %v846, 8
      %vm884 = vcmp.lt.s32.totalorder %v847, 8
      %vm885 = vcmp.lt.s32.totalorder %v848, 8
      %vm886 = vcmp.lt.s32.totalorder %v849, 8
      %vm887 = vcmp.lt.s32.totalorder %v850, 8
      %vm888 = vcmp.lt.s32.totalorder %v851, 8
      %vm889 = vcmp.lt.s32.totalorder %v852, 8
      %vm890 = vcmp.lt.s32.totalorder %v853, 8
      %vm891 = vcmp.lt.s32.totalorder %v854, 8
      %vm892 = vcmp.lt.s32.totalorder %v855, 8
      %vm893 = vcmp.lt.s32.totalorder %v856, 8
      %vm894 = vcmp.lt.s32.totalorder %v857, 8
      %vm895 = vmand %vm863, %vm879
      %vm896 = vmand %vm864, %vm880
      %vm897 = vmand %vm865, %vm881
      %vm898 = vmand %vm866, %vm882
      %vm899 = vmand %vm867, %vm883
      %vm900 = vmand %vm868, %vm884
      %vm901 = vmand %vm869, %vm885
      %vm902 = vmand %vm870, %vm886
      %vm903 = vmand %vm871, %vm887
      %vm904 = vmand %vm872, %vm888
      %vm905 = vmand %vm873, %vm889
      %vm906 = vmand %vm874, %vm890
      %vm907 = vmand %vm875, %vm891
      %vm908 = vmand %vm876, %vm892
      %vm909 = vmand %vm877, %vm893
      %vm910 = vmand %vm878, %vm894
      %vm911 = vcmp.lt.s32.totalorder %v862, 8
      %vm912 = vmand %vm895, %vm911
      %vm913 = vmand %vm896, %vm911
      %vm914 = vmand %vm897, %vm911
      %vm915 = vmand %vm898, %vm911
      %vm916 = vmand %vm899, %vm911
      %vm917 = vmand %vm900, %vm911
      %vm918 = vmand %vm901, %vm911
      %vm919 = vmand %vm902, %vm911
      %vm920 = vmand %vm903, %vm911
      %vm921 = vmand %vm904, %vm911
      %vm922 = vmand %vm905, %vm911
      %vm923 = vmand %vm906, %vm911
      %vm924 = vmand %vm907, %vm911
      %vm925 = vmand %vm908, %vm911
      %vm926 = vmand %vm909, %vm911
      %vm927 = vmand %vm910, %vm911
      %928 = vset.pattern.permute.xlu0 0
      %929 = vperm.xlu0 %928, %v806
      %v930 = vpop.permute.xlu0 %929
      %931 = vset.pattern.permute.xlu0 0
      %932 = vperm.xlu0 %931, %v807
      %v933 = vpop.permute.xlu0 %932
      %934 = vset.pattern.permute.xlu0 0
      %935 = vperm.xlu0 %934, %v808
      %v936 = vpop.permute.xlu0 %935
      %937 = vset.pattern.permute.xlu0 0
      %938 = vperm.xlu0 %937, %v809
      %v939 = vpop.permute.xlu0 %938
      %940 = vset.pattern.permute.xlu0 0
      %941 = vperm.xlu0 %940, %v810
      %v942 = vpop.permute.xlu0 %941
      %943 = vset.pattern.permute.xlu0 0
      %944 = vperm.xlu0 %943, %v811
      %v945 = vpop.permute.xlu0 %944
      %946 = vset.pattern.permute.xlu0 0
      %947 = vperm.xlu0 %946, %v812
      %v948 = vpop.permute.xlu0 %947
      %949 = vset.pattern.permute.xlu0 0
      %950 = vperm.xlu0 %949, %v813
      %v951 = vpop.permute.xlu0 %950
      %952 = vset.pattern.permute.xlu0 0
      %953 = vperm.xlu0 %952, %v814
      %v954 = vpop.permute.xlu0 %953
      %955 = vset.pattern.permute.xlu0 0
      %956 = vperm.xlu0 %955, %v815
      %v957 = vpop.permute.xlu0 %956
      %958 = vset.pattern.permute.xlu0 0
      %959 = vperm.xlu0 %958, %v816
      %v960 = vpop.permute.xlu0 %959
      %961 = vset.pattern.permute.xlu0 0
      %962 = vperm.xlu0 %961, %v817
      %v963 = vpop.permute.xlu0 %962
      %964 = vset.pattern.permute.xlu0 0
      %965 = vperm.xlu0 %964, %v818
      %v966 = vpop.permute.xlu0 %965
      %967 = vset.pattern.permute.xlu0 0
      %968 = vperm.xlu0 %967, %v819
      %v969 = vpop.permute.xlu0 %968
      %970 = vset.pattern.permute.xlu0 0
      %971 = vperm.xlu0 %970, %v820
      %v972 = vpop.permute.xlu0 %971
      %973 = vset.pattern.permute.xlu0 0
      %974 = vperm.xlu0 %973, %v821
      %v975 = vpop.permute.xlu0 %974
      %v976 = vperm.slane %v822, 0
      %vm977 = vcmp.eq.s32.totalorder %v930, %v976
      %vm978 = vcmp.eq.s32.totalorder %v933, %v976
      %vm979 = vcmp.eq.s32.totalorder %v936, %v976
      %vm980 = vcmp.eq.s32.totalorder %v939, %v976
      %vm981 = vcmp.eq.s32.totalorder %v942, %v976
      %vm982 = vcmp.eq.s32.totalorder %v945, %v976
      %vm983 = vcmp.eq.s32.totalorder %v948, %v976
      %vm984 = vcmp.eq.s32.totalorder %v951, %v976
      %vm985 = vcmp.eq.s32.totalorder %v954, %v976
      %vm986 = vcmp.eq.s32.totalorder %v957, %v976
      %vm987 = vcmp.eq.s32.totalorder %v960, %v976
      %vm988 = vcmp.eq.s32.totalorder %v963, %v976
      %vm989 = vcmp.eq.s32.totalorder %v966, %v976
      %vm990 = vcmp.eq.s32.totalorder %v969, %v976
      %vm991 = vcmp.eq.s32.totalorder %v972, %v976
      %vm992 = vcmp.eq.s32.totalorder %v975, %v976
      %v993 = vsub.f32 1.0, %v609
      %v994 = vsub.f32 1.0, %v621
      %v995 = vsub.f32 1.0, %v633
      %v996 = vsub.f32 1.0, %v645
      %v997 = vsub.f32 1.0, %v657
      %v998 = vsub.f32 1.0, %v669
      %v999 = vsub.f32 1.0, %v681
      %v1000 = vsub.f32 1.0, %v693
      %v1001 = vsub.f32 1.0, %v705
      %v1002 = vsub.f32 1.0, %v717
      %v1003 = vsub.f32 1.0, %v729
      %v1004 = vsub.f32 1.0, %v741
      %v1005 = vsub.f32 1.0, %v753
      %v1006 = vsub.f32 1.0, %v765
      %v1007 = vsub.f32 1.0, %v777
      %v1008 = vsub.f32 1.0, %v789
      %v1009 = vmax.f32 %v993, 0.0
      %v1010 = vmax.f32 %v994, 0.0
      %v1011 = vmax.f32 %v995, 0.0
      %v1012 = vmax.f32 %v996, 0.0
      %v1013 = vmax.f32 %v997, 0.0
      %v1014 = vmax.f32 %v998, 0.0
      %v1015 = vmax.f32 %v999, 0.0
      %v1016 = vmax.f32 %v1000, 0.0
      %v1017 = vmax.f32 %v1001, 0.0
      %v1018 = vmax.f32 %v1002, 0.0
      %v1019 = vmax.f32 %v1003, 0.0
      %v1020 = vmax.f32 %v1004, 0.0
      %v1021 = vmax.f32 %v1005, 0.0
      %v1022 = vmax.f32 %v1006, 0.0
      %v1023 = vmax.f32 %v1007, 0.0
      %v1024 = vmax.f32 %v1008, 0.0
      %vm1025 = vmand %vm912, %vm977
      %vm1026 = vmand %vm913, %vm978
      %vm1027 = vmand %vm914, %vm979
      %vm1028 = vmand %vm915, %vm980
      %vm1029 = vmand %vm916, %vm981
      %vm1030 = vmand %vm917, %vm982
      %vm1031 = vmand %vm918, %vm983
      %vm1032 = vmand %vm919, %vm984
      %vm1033 = vmand %vm920, %vm985
      %vm1034 = vmand %vm921, %vm986
      %vm1035 = vmand %vm922, %vm987
      %vm1036 = vmand %vm923, %vm988
      %vm1037 = vmand %vm924, %vm989
      %vm1038 = vmand %vm925, %vm990
      %vm1039 = vmand %vm926, %vm991
      %vm1040 = vmand %vm927, %vm992
      %v1041 = vsel %vm1025, %v609, 0.0
      %v1042 = vsel %vm1026, %v621, 0.0
      %v1043 = vsel %vm1027, %v633, 0.0
      %v1044 = vsel %vm1028, %v645, 0.0
      %v1045 = vsel %vm1029, %v657, 0.0
      %v1046 = vsel %vm1030, %v669, 0.0
      %v1047 = vsel %vm1031, %v681, 0.0
      %v1048 = vsel %vm1032, %v693, 0.0
      %v1049 = vsel %vm1033, %v705, 0.0
      %v1050 = vsel %vm1034, %v717, 0.0
      %v1051 = vsel %vm1035, %v729, 0.0
      %v1052 = vsel %vm1036, %v741, 0.0
      %v1053 = vsel %vm1037, %v753, 0.0
      %v1054 = vsel %vm1038, %v765, 0.0
      %v1055 = vsel %vm1039, %v777, 0.0
      %v1056 = vsel %vm1040, %v789, 0.0
      %vm1057 = vmxor %vm977, 1
      %vm1058 = vmxor %vm978, 1
      %vm1059 = vmxor %vm979, 1
      %vm1060 = vmxor %vm980, 1
      %vm1061 = vmxor %vm981, 1
      %vm1062 = vmxor %vm982, 1
      %vm1063 = vmxor %vm983, 1
      %vm1064 = vmxor %vm984, 1
      %vm1065 = vmxor %vm985, 1
      %vm1066 = vmxor %vm986, 1
      %vm1067 = vmxor %vm987, 1
      %vm1068 = vmxor %vm988, 1
      %vm1069 = vmxor %vm989, 1
      %vm1070 = vmxor %vm990, 1
      %vm1071 = vmxor %vm991, 1
      %vm1072 = vmxor %vm992, 1
      %vm1073 = vmand %vm912, %vm1057
      %vm1074 = vmand %vm913, %vm1058
      %vm1075 = vmand %vm914, %vm1059
      %vm1076 = vmand %vm915, %vm1060
      %vm1077 = vmand %vm916, %vm1061
      %vm1078 = vmand %vm917, %vm1062
      %vm1079 = vmand %vm918, %vm1063
      %vm1080 = vmand %vm919, %vm1064
      %vm1081 = vmand %vm920, %vm1065
      %vm1082 = vmand %vm921, %vm1066
      %vm1083 = vmand %vm922, %vm1067
      %vm1084 = vmand %vm923, %vm1068
      %vm1085 = vmand %vm924, %vm1069
      %vm1086 = vmand %vm925, %vm1070
      %vm1087 = vmand %vm926, %vm1071
      %vm1088 = vmand %vm927, %vm1072
      %v1089 = vsel %vm1073, %v1009, 0.0
      %v1090 = vsel %vm1074, %v1010, 0.0
      %v1091 = vsel %vm1075, %v1011, 0.0
      %v1092 = vsel %vm1076, %v1012, 0.0
      %v1093 = vsel %vm1077, %v1013, 0.0
      %v1094 = vsel %vm1078, %v1014, 0.0
      %v1095 = vsel %vm1079, %v1015, 0.0
      %v1096 = vsel %vm1080, %v1016, 0.0
      %v1097 = vsel %vm1081, %v1017, 0.0
      %v1098 = vsel %vm1082, %v1018, 0.0
      %v1099 = vsel %vm1083, %v1019, 0.0
      %v1100 = vsel %vm1084, %v1020, 0.0
      %v1101 = vsel %vm1085, %v1021, 0.0
      %v1102 = vsel %vm1086, %v1022, 0.0
      %v1103 = vsel %vm1087, %v1023, 0.0
      %v1104 = vsel %vm1088, %v1024, 0.0
      %v1105 = vadd.f32 %v1041, %v1089
      %v1106 = vadd.f32 %v1042, %v1090
      %v1107 = vadd.f32 %v1043, %v1091
      %v1108 = vadd.f32 %v1044, %v1092
      %v1109 = vadd.f32 %v1045, %v1093
      %v1110 = vadd.f32 %v1046, %v1094
      %v1111 = vadd.f32 %v1047, %v1095
      %v1112 = vadd.f32 %v1048, %v1096
      %v1113 = vadd.f32 %v1049, %v1097
      %v1114 = vadd.f32 %v1050, %v1098
      %v1115 = vadd.f32 %v1051, %v1099
      %v1116 = vadd.f32 %v1052, %v1100
      %v1117 = vadd.f32 %v1053, %v1101
      %v1118 = vadd.f32 %v1054, %v1102
      %v1119 = vadd.f32 %v1055, %v1103
      %v1120 = vadd.f32 %v1056, %v1104
      %v1121 = vadd.f32 %v1105, %v1106
      %v1122 = vadd.f32 %v1121, %v1107
      %v1123 = vadd.f32 %v1122, %v1108
      %v1124 = vadd.f32 %v1123, %v1109
      %v1125 = vadd.f32 %v1124, %v1110
      %v1126 = vadd.f32 %v1125, %v1111
      %v1127 = vadd.f32 %v1126, %v1112
      %v1128 = vadd.f32 %v1127, %v1113
      %v1129 = vadd.f32 %v1128, %v1114
      %v1130 = vadd.f32 %v1129, %v1115
      %v1131 = vadd.f32 %v1130, %v1116
      %v1132 = vadd.f32 %v1131, %v1117
      %v1133 = vadd.f32 %v1132, %v1118
      %v1134 = vadd.f32 %v1133, %v1119
      %v1135 = vadd.f32 %v1134, %v1120
      %p1136 = scmp.eq.s32.totalorder %s152, %s151
      // Predicated region
      $region34: #{tpu_custom_call.1} parent=32 // pred_check
        %p1137 = pneg %p1136
      $region35: #{tpu_custom_call.1} parent=32 // pred_check_branch
        %1139 = sbr.rel (%p1137) target = $region37
      $region36: #{tpu_custom_call.1} parent=32 // pred_region
        %1140 = vst [vmem:[#allocation8] sm:$0xff] 0.0
      $region37: #{tpu_custom_call.1} parent=32 // pred_fallthru
        _
      %v1141 = vld [vmem:[#allocation8] sm:$0xff]
      %v1142 = vadd.f32 %v1141, %v1135
      %1143 = vst [vmem:[#allocation8] sm:$0xff] %v1142
    $region33: #{tpu_custom_call.1} parent=1 // pred_fallthru
      _
    // Predicated region
    $region38: #{tpu_custom_call.1} parent=1 // pred_check
      _
    $region39: #{tpu_custom_call.1} parent=1 // pred_check_branch
      %1145 = sbr.rel (0) target = $region41
    $region40: #{tpu_custom_call.1} parent=1 // pred_region
      %s1146 = sld [smem:[#allocation4]]
      %s1147 = sld [smem:[#allocation5]]
      %s1148 = smul.u32 16, %s1146
      %1150 = vsyncadd [#allocation7], 0
      %s1151 = sadd.s32 %s1147, %s1148
      %s1152 = smul.addr %s1151, 8
      %s1153 = scalar_lea.hbm %s8, %s1152
      %s1154 = sshll.u32 [#allocation6], 4
      %s1155 = int_to_ptr.vmem [resolvable:$true] %s1154
      %s1156 = sshll.u32 %s1153, 4
      %s1157 = int_to_ptr.hbm [resolvable:$true] %s1156
      %1162 = dma.vmem_to_hbm [thread:$0]  %s1155, 2048, %s1157, [#allocation7], 128, 128, 8
    $region41: #{tpu_custom_call.1} parent=1 // pred_fallthru
      _
    // Predicated region
    $region42: #{tpu_custom_call.1} parent=1 // pred_check
      _
    $region43: #{tpu_custom_call.1} parent=1 // pred_check_branch
      %1164 = sbr.rel (0) target = $region45
    $region44: #{tpu_custom_call.1} parent=1 // pred_region
      %s1165 = sld [smem:[#allocation4]]
      %1167 = vsyncadd [#allocation9], 0
      %s1168 = smul.addr %s1165, 8
      %s1169 = scalar_lea.hbm %s9, %s1168
      %s1171 = sshll.u32 [#allocation8], 4
      %s1172 = int_to_ptr.vmem [resolvable:$true] %s1171
      %s1173 = sshll.u32 %s1169, 4
      %s1174 = int_to_ptr.hbm [resolvable:$true] %s1173
      %1176 = dma.vmem_to_hbm [thread:$0]  %s1172, 128, %s1174, [#allocation9]
    $region45: #{tpu_custom_call.1} parent=1 // pred_fallthru
      _
    // Predicated region
    $region46: #{tpu_custom_call.1} parent=1 // pred_check
      _
    $region47: #{tpu_custom_call.1} parent=1 // pred_check_branch
      %1178 = sbr.rel (0) target = $region49
    $region48: #{tpu_custom_call.1} parent=1 // pred_region
      %1180 = dma.done [#allocation7], 2048
    $region49: #{tpu_custom_call.1} parent=1 // pred_fallthru
      _
    // Predicated region
    $region50: #{tpu_custom_call.1} parent=1 // pred_check
      _
    $region51: #{tpu_custom_call.1} parent=1 // pred_check_branch
      %1182 = sbr.rel (0) target = $region53
    $region52: #{tpu_custom_call.1} parent=1 // pred_region
      %1184 = dma.done [#allocation9], 128
    $region53: #{tpu_custom_call.1} parent=1 // pred_fallthru
      _
    %1185 = vsyncpa [#allocation7], 1
    %1186 = vsyncpa [#allocation9], 1

</llo_original>
